<compile_context>
chip_gen: v7x
topology: tpu7x:2x2x1
jax: 0.10.0
libtpu: 0.0.40
codegen_flags: <defaults>
</compile_context>

<pallas_src>
import functools

import jax
import jax.numpy as jnp
import numpy as np
from jax import lax
from jax.experimental import pallas as pl
from jax.experimental.pallas import tpu as pltpu

EPS = 1e-5          # torch.nn.BatchNorm2d default
LANE = 128          # TPU lane width


def _round_up(x, m):
    return (x + m - 1) // m * m


def _row_block(h, max_rows=8):
    """Largest divisor of h that is <= max_rows (so H % TR == 0)."""
    for t in range(min(h, max_rows), 0, -1):
        if h % t == 0:
            return t
    return 1


# ---------------------------------------------------------------------------
# Fused Bottleneck kernel: one grid step == one batch image, all in VMEM.
# ---------------------------------------------------------------------------
def _bottleneck_kernel(x_ref, w1_ref, b1_ref, w2k_ref, b2_ref, w3_ref, b3_ref,
                       o_ref, o1k_ref, *, dilation, row_block):
    d = dilation
    TR = row_block
    H, W, Cp = x_ref.shape
    Pp = w1_ref.shape[1]
    Cop = w3_ref.shape[1]
    K2 = 3 * Pp                                    # packed contraction depth

    # ---- conv1 (1x1) + folded BN1 + ReLU (whole image, one MXU pass) -------
    x2d = x_ref[...].reshape(H * W, Cp)                               # bf16
    o1 = jnp.dot(x2d, w1_ref[...], preferred_element_type=jnp.float32)
    o1 = jnp.maximum(o1 + b1_ref[...], 0.0)
    o1_b = o1.astype(jnp.bfloat16).reshape(H, W, Pp)

    # ---- stage conv2 operand, K-packed along kx (lane axis) ----------------
    # slot layout: [ o1[x-d] | o1[x] | o1[x+d] ]   (zeros outside the image)
    zcol = jnp.zeros((H, d, Pp), jnp.bfloat16)
    left = jnp.concatenate([zcol, o1_b[:, :W - d, :]], axis=1)    # o1[x - d]
    right = jnp.concatenate([o1_b[:, d:, :], zcol], axis=1)       # o1[x + d]
    packed = jnp.concatenate([left, o1_b, right], axis=-1)        # (H, W, 3Pp)

    # Zero only the 2*d halo rows each step (tiny; interior fully overwritten
    # below, and per-step zeroing stays correct under megacore grid sharding).
    zrow = jnp.zeros((d, W, K2), jnp.bfloat16)
    o1k_ref[:d, :, :] = zrow
    o1k_ref[d + H:, :, :] = zrow
    o1k_ref[d:d + H, :, :] = packed     # lane/sublane-aligned, full-width store

    # ---- conv2 (3x3) + BN2 + ReLU -> conv3 (1x1) + BN3 + residual + ReLU ---
    # Row-blocked: 3 dots of K = 3*Pp per block; every read is a leading-dim
    # (row) slice of the scratch, so no per-tap retiling copies.
    def body(rb, carry):
        r0 = pl.multiple_of(rb * TR, TR)
        rows0 = o1k_ref[pl.ds(r0, TR), :, :].reshape(TR * W, K2)          # ky=0
        acc = jnp.dot(rows0, w2k_ref[0], preferred_element_type=jnp.float32)
        rows1 = o1k_ref[pl.ds(r0 + d, TR), :, :].reshape(TR * W, K2)      # ky=1
        acc = acc + jnp.dot(rows1, w2k_ref[1], preferred_element_type=jnp.float32)
        rows2 = o1k_ref[pl.ds(r0 + 2 * d, TR), :, :].reshape(TR * W, K2)  # ky=2
        acc = acc + jnp.dot(rows2, w2k_ref[2], preferred_element_type=jnp.float32)
        o2 = jnp.maximum(acc + b2_ref[...], 0.0).astype(jnp.bfloat16)

        a3 = jnp.dot(o2, w3_ref[...], preferred_element_type=jnp.float32)
        res = x_ref[pl.ds(r0, TR), :, :].reshape(TR * W, Cp).astype(jnp.float32)
        out = jnp.maximum(a3 + b3_ref[...] + res, 0.0)
        o_ref[pl.ds(r0, TR), :, :] = out.reshape(TR, W, Cop).astype(o_ref.dtype)
        return carry

    lax.fori_loop(0, H // TR, body, 0)


# ---------------------------------------------------------------------------
# One-time parameter packing (BN folding, channel padding, K-packing, bf16).
# ---------------------------------------------------------------------------
def _fold_bn(gamma, beta, mean, var, eps=EPS):
    scale = gamma / jnp.sqrt(var + eps)
    bias = beta - mean * scale
    return scale, bias


def pack_params(params, inplanes):
    """Fold BN into conv weights, pad channels to 128 lanes, K-pack the 3x3
    conv along kx, cast to bf16.  Call ONCE per model (out of the hot path)."""
    planes = params["w1"].shape[0]
    cout = 4 * planes
    cp = _round_up(inplanes, LANE)
    pp = _round_up(planes, LANE)
    cop = _round_up(cout, LANE)

    s1, b1 = _fold_bn(params["g1"], params["b1"], params["m1"], params["v1"])
    s2, b2 = _fold_bn(params["g2"], params["b2"], params["m2"], params["v2"])
    s3, b3 = _fold_bn(params["g3"], params["b3"], params["m3"], params["v3"])

    # conv1: (planes, inplanes, 1, 1) -> (inplanes, planes), scale folded in.
    w1 = params["w1"].reshape(planes, inplanes).T * s1[None, :]
    w1p = jnp.zeros((cp, pp), jnp.float32).at[:inplanes, :planes].set(w1)

    # conv2: (cout, cin, ky, kx) -> K-packed (ky, kx*Pp + cin, cout).
    w2f = params["w2"] * s2[:, None, None, None]
    w2t = jnp.transpose(w2f, (2, 3, 1, 0))                    # (ky,kx,cin,cout)
    w2p = jnp.zeros((3, 3, pp, pp), jnp.float32).at[:, :, :planes, :planes].set(w2t)
    w2k = w2p.reshape(3, 3 * pp, pp)

    # conv3: (cout, planes, 1, 1) -> (planes, cout), scale folded in.
    w3 = params["w3"].reshape(cout, planes).T * s3[None, :]
    w3p = jnp.zeros((pp, cop), jnp.float32).at[:planes, :cout].set(w3)

    def padb(b, n):
        return jnp.zeros((1, n), jnp.float32).at[0, :b.shape[0]].set(b)

    return {
        "w1": w1p.astype(jnp.bfloat16), "b1": padb(b1, pp),
        "w2k": w2k.astype(jnp.bfloat16), "b2": padb(b2, pp),
        "w3": w3p.astype(jnp.bfloat16), "b3": padb(b3, cop),
        "planes": planes, "cout": cout, "inplanes": inplanes,
    }


# ---------------------------------------------------------------------------
# Core forward (padded NHWC bf16 in / out -> zero per-block layout traffic).
# ---------------------------------------------------------------------------
def bottleneck_forward_nhwc(x_nhwc, packed, stride=1, dilation=1):
    n, h, w, cp = x_nhwc.shape
    pp = packed["w1"].shape[1]
    cop = packed["w3"].shape[1]
    cout = packed["cout"]
    if stride != 1 or packed["inplanes"] != cout:
        # TODO(synk): downsample branch (1x1 conv + BN on the residual) and
        # stride != 1 not implemented (PyTorch module default downsample=None).
        raise NotImplementedError(
            "identity residual requires stride == 1 and inplanes == 4*planes")
    if cp != packed["w1"].shape[0] or cp != cop:
        raise ValueError("channel padding mismatch")

    d = dilation
    hp = h + 2 * d
    tr = _row_block(h)

    kernel = functools.partial(_bottleneck_kernel, dilation=d, row_block=tr)

    flops = int(2 * n * (h * w * cp * pp + 9 * h * w * pp * pp + h * w * pp * cop))
    bytes_accessed = int(
        x_nhwc.size * 2 + n * h * w * cop * 2
        + (packed["w1"].size + packed["w2k"].size + packed["w3"].size) * 2
        + (packed["b1"].size + packed["b2"].size + packed["b3"].size) * 4)

    # TODO(synk): add a spatial row-block grid axis (overlapping/halo blocks)
    # for batch=1 megacore sharding and to bound scratch VMEM at large H*W;
    # also single-buffer the grid-invariant weight blocks (pl.Buffered(1))
    # once verified on the target jax version.
    out = pl.pallas_call(
        kernel,
        out_shape=jax.ShapeDtypeStruct((n, h, w, cop), jnp.bfloat16),
        grid=(n,),
        in_specs=[
            pl.BlockSpec((None, h, w, cp), lambda i: (i, 0, 0, 0)),   # x
            pl.BlockSpec((cp, pp), lambda i: (0, 0)),                 # w1
            pl.BlockSpec((1, pp), lambda i: (0, 0)),                  # b1
            pl.BlockSpec((3, 3 * pp, pp), lambda i: (0, 0, 0)),       # w2 (K-packed)
            pl.BlockSpec((1, pp), lambda i: (0, 0)),                  # b2
            pl.BlockSpec((pp, cop), lambda i: (0, 0)),                # w3
            pl.BlockSpec((1, cop), lambda i: (0, 0)),                 # b3
        ],
        out_specs=pl.BlockSpec((None, h, w, cop), lambda i: (i, 0, 0, 0)),
        scratch_shapes=[pltpu.VMEM((hp, w, 3 * pp), jnp.bfloat16)],   # K-packed o1
        compiler_params=pltpu.CompilerParams(
            dimension_semantics=("parallel",),
            vmem_limit_bytes=32 * 1024 * 1024),
        cost_estimate=pl.CostEstimate(
            flops=flops, transcendentals=0, bytes_accessed=bytes_accessed),
    )(x_nhwc, packed["w1"], packed["b1"], packed["w2k"], packed["b2"],
      packed["w3"], packed["b3"])
    return out


# ---------------------------------------------------------------------------
# Demo wrapper: NCHW f32 in -> NCHW bf16 out.  In a full ResNet the layout
# conversion / channel padding is hoisted outside the chain of blocks.
# ---------------------------------------------------------------------------
def bottleneck_forward(x_nchw, packed, stride=1, dilation=1):
    n, cin, h, w = x_nchw.shape
    cp = packed["w1"].shape[0]
    x = jnp.transpose(x_nchw, (0, 2, 3, 1))
    x = jnp.pad(x, ((0, 0), (0, 0), (0, 0), (0, cp - cin))).astype(jnp.bfloat16)
    out = bottleneck_forward_nhwc(x, packed, stride=stride, dilation=dilation)
    out = out[..., :packed["cout"]]
    return jnp.transpose(out, (0, 3, 1, 2))


# ---------------------------------------------------------------------------
# Pure-JAX f32 reference (verification only).
# ---------------------------------------------------------------------------
def reference_forward(x, p, stride=1, dilation=1):
    def conv(x, w, stride=1, padding=0, dil=1):
        return jax.lax.conv_general_dilated(
            x, w, window_strides=(stride, stride),
            padding=((padding, padding), (padding, padding)),
            rhs_dilation=(dil, dil),
            dimension_numbers=("NCHW", "OIHW", "NCHW"))

    def bn(x, g, b, m, v):
        sh = (1, -1, 1, 1)
        return (x - m.reshape(sh)) / jnp.sqrt(v.reshape(sh) + EPS) * g.reshape(sh) + b.reshape(sh)

    out = jax.nn.relu(bn(conv(x, p["w1"]), p["g1"], p["b1"], p["m1"], p["v1"]))
    out = jax.nn.relu(bn(conv(out, p["w2"], stride, dilation, dilation),
                         p["g2"], p["b2"], p["m2"], p["v2"]))
    out = bn(conv(out, p["w3"]), p["g3"], p["b3"], p["m3"], p["v3"])
    out = jax.nn.relu(out + x)
    return out


# ---------------------------------------------------------------------------
if __name__ == "__main__":
    key = jax.random.PRNGKey(0)
    N, INPLANES, PLANES, H, W = 2, 16, 4, 16, 16   # inplanes == 4*planes
    STRIDE, DILATION = 1, 1

    ks = jax.random.split(key, 16)
    params = {
        "w1": jax.random.normal(ks[0], (PLANES, INPLANES, 1, 1), jnp.float32) * 0.1,
        "w2": jax.random.normal(ks[1], (PLANES, PLANES, 3, 3), jnp.float32) * 0.1,
        "w3": jax.random.normal(ks[2], (PLANES * 4, PLANES, 1, 1), jnp.float32) * 0.1,
        "g1": jax.random.normal(ks[3], (PLANES,), jnp.float32) * 0.1 + 1.0,
        "b1": jax.random.normal(ks[4], (PLANES,), jnp.float32) * 0.1,
        "m1": jax.random.normal(ks[5], (PLANES,), jnp.float32) * 0.1,
        "v1": jnp.abs(jax.random.normal(ks[6], (PLANES,), jnp.float32)) * 0.5 + 0.5,
        "g2": jax.random.normal(ks[7], (PLANES,), jnp.float32) * 0.1 + 1.0,
        "b2": jax.random.normal(ks[8], (PLANES,), jnp.float32) * 0.1,
        "m2": jax.random.normal(ks[9], (PLANES,), jnp.float32) * 0.1,
        "v2": jnp.abs(jax.random.normal(ks[10], (PLANES,), jnp.float32)) * 0.5 + 0.5,
        "g3": jax.random.normal(ks[11], (PLANES * 4,), jnp.float32) * 0.1 + 1.0,
        "b3": jax.random.normal(ks[12], (PLANES * 4,), jnp.float32) * 0.1,
        "m3": jax.random.normal(ks[13], (PLANES * 4,), jnp.float32) * 0.1,
        "v3": jnp.abs(jax.random.normal(ks[14], (PLANES * 4,), jnp.float32)) * 0.5 + 0.5,
    }
    x = jax.random.normal(ks[15], (N, INPLANES, H, W), jnp.float32)

    packed = pack_params(params, INPLANES)          # one-time, outside hot path
    out = bottleneck_forward(x, packed, stride=STRIDE, dilation=DILATION)
    out = jax.block_until_ready(out)

    ref = jax.block_until_ready(reference_forward(x, params, STRIDE, DILATION))
    # bf16 matmul inputs, bf16 residual (input cast in wrapper) and bf16 output
    # -> loosened tolerance vs the f32 reference.
    np.testing.assert_allclose(np.asarray(out.astype(jnp.float32)),
                               np.asarray(ref), rtol=4e-2, atol=4e-2)

    print("KERNEL_OK")
</pallas_src>

<mosaic_0001>
module attributes {stable_mosaic.version = 11 : i64} {
  func.func @_bottleneck_kernel(%arg0: i32, %arg1: memref<1x16x16x128xbf16, #tpu.memory_space<vmem>>, %arg2: memref<128x128xbf16, #tpu.memory_space<vmem>>, %arg3: memref<1x128xf32, #tpu.memory_space<vmem>>, %arg4: memref<3x384x128xbf16, #tpu.memory_space<vmem>>, %arg5: memref<1x128xf32, #tpu.memory_space<vmem>>, %arg6: memref<128x128xbf16, #tpu.memory_space<vmem>>, %arg7: memref<1x128xf32, #tpu.memory_space<vmem>>, %arg8: memref<1x16x16x128xbf16, #tpu.memory_space<vmem>>, %arg9: memref<18x16x384xbf16, #tpu.memory_space<vmem>>) attributes {dimension_semantics = [#tpu.dimension_semantics<parallel>], iteration_bounds = array<i64: 2>, scalar_prefetch = 0 : i64, scratch_operands = 1 : i64, tpu.core_type = #tpu.core_type<tc>, window_params = [{transform_indices = @transform_0, window_bounds = array<i64: 1, 16, 16, 128>}, {pipeline_mode = #tpu.pipeline_mode<synchronous>, transform_indices = @transform_1, window_bounds = array<i64: 128, 128>}, {pipeline_mode = #tpu.pipeline_mode<synchronous>, transform_indices = @transform_2, window_bounds = array<i64: 1, 128>}, {pipeline_mode = #tpu.pipeline_mode<synchronous>, transform_indices = @transform_3, window_bounds = array<i64: 3, 384, 128>}, {pipeline_mode = #tpu.pipeline_mode<synchronous>, transform_indices = @transform_4, window_bounds = array<i64: 1, 128>}, {pipeline_mode = #tpu.pipeline_mode<synchronous>, transform_indices = @transform_5, window_bounds = array<i64: 128, 128>}, {pipeline_mode = #tpu.pipeline_mode<synchronous>, transform_indices = @transform_6, window_bounds = array<i64: 1, 128>}, {transform_indices = @transform_7, window_bounds = array<i64: 1, 16, 16, 128>}]} {
    %c0 = arith.constant 0 : index
    %c0_0 = arith.constant 0 : index
    %c0_1 = arith.constant 0 : index
    %c0_2 = arith.constant 0 : index
    %0 = vector.load %arg1[%c0, %c0_0, %c0_1, %c0_2] : memref<1x16x16x128xbf16, #tpu.memory_space<vmem>>, vector<1x16x16x128xbf16>
    %1 = vector.shape_cast %0 : vector<1x16x16x128xbf16> to vector<16x16x128xbf16>
    %2 = vector.shape_cast %1 : vector<16x16x128xbf16> to vector<256x128xbf16>
    %c0_3 = arith.constant 0 : index
    %c0_4 = arith.constant 0 : index
    %3 = vector.load %arg2[%c0_3, %c0_4] : memref<128x128xbf16, #tpu.memory_space<vmem>>, vector<128x128xbf16>
    %cst = arith.constant dense<0.000000e+00> : vector<256x128xf32>
    %4 = tpu.matmul %2, %3, %cst {dimension_numbers = #tpu.dot_dimension_numbers<[1], [0], [0], [1], [0, 0, 1, 1], [], []>} : vector<256x128xbf16>, vector<128x128xbf16>, vector<256x128xf32> -> vector<256x128xf32>
    %c0_5 = arith.constant 0 : index
    %c0_6 = arith.constant 0 : index
    %5 = vector.load %arg3[%c0_5, %c0_6] : memref<1x128xf32, #tpu.memory_space<vmem>>, vector<1x128xf32>
    %6 = vector.broadcast %5 : vector<1x128xf32> to vector<256x128xf32>
    %7 = arith.addf %4, %6 : vector<256x128xf32>
    %cst_7 = arith.constant 0.000000e+00 : f32
    %8 = vector.broadcast %cst_7 : f32 to vector<256x128xf32>
    %9 = arith.maximumf %7, %8 : vector<256x128xf32>
    %10 = arith.truncf %9 : vector<256x128xf32> to vector<256x128xbf16>
    %11 = vector.shape_cast %10 : vector<256x128xbf16> to vector<16x16x128xbf16>
    %cst_8 = arith.constant 0.000000e+00 : bf16
    %12 = vector.broadcast %cst_8 : bf16 to vector<16x1x128xbf16>
    %13 = vector.extract_strided_slice %11 {offsets = [0, 0, 0], sizes = [16, 15, 128], strides = [1, 1, 1]} : vector<16x16x128xbf16> to vector<16x15x128xbf16>
    %14 = tpu.concatenate %12, %13 in 1 : vector<16x1x128xbf16>, vector<16x15x128xbf16> -> vector<16x16x128xbf16>
    %15 = vector.extract_strided_slice %11 {offsets = [0, 1, 0], sizes = [16, 15, 128], strides = [1, 1, 1]} : vector<16x16x128xbf16> to vector<16x15x128xbf16>
    %16 = tpu.concatenate %15, %12 in 1 : vector<16x15x128xbf16>, vector<16x1x128xbf16> -> vector<16x16x128xbf16>
    %17 = tpu.concatenate %14, %11, %16 in 2 : vector<16x16x128xbf16>, vector<16x16x128xbf16>, vector<16x16x128xbf16> -> vector<16x16x384xbf16>
    %cst_9 = arith.constant 0.000000e+00 : bf16
    %18 = vector.broadcast %cst_9 : bf16 to vector<1x16x384xbf16>
    %c0_10 = arith.constant 0 : index
    %c0_11 = arith.constant 0 : index
    %c0_12 = arith.constant 0 : index
    %19 = vector.load %arg9[%c0_10, %c0_11, %c0_12] : memref<18x16x384xbf16, #tpu.memory_space<vmem>>, vector<1x16x384xbf16>
    tpu.vector_store %arg9[%c0_10, %c0_11, %c0_12], %18 {strides = array<i32>} : memref<18x16x384xbf16, #tpu.memory_space<vmem>>, vector<1x16x384xbf16>,
    %c17 = arith.constant 17 : index
    %c0_13 = arith.constant 0 : index
    %c0_14 = arith.constant 0 : index
    %20 = vector.load %arg9[%c17, %c0_13, %c0_14] : memref<18x16x384xbf16, #tpu.memory_space<vmem>>, vector<1x16x384xbf16>
    tpu.vector_store %arg9[%c17, %c0_13, %c0_14], %18 {strides = array<i32>} : memref<18x16x384xbf16, #tpu.memory_space<vmem>>, vector<1x16x384xbf16>,
    %c1 = arith.constant 1 : index
    %c0_15 = arith.constant 0 : index
    %c0_16 = arith.constant 0 : index
    %21 = vector.load %arg9[%c1, %c0_15, %c0_16] : memref<18x16x384xbf16, #tpu.memory_space<vmem>>, vector<16x16x384xbf16>
    tpu.vector_store %arg9[%c1, %c0_15, %c0_16], %17 {strides = array<i32>} : memref<18x16x384xbf16, #tpu.memory_space<vmem>>, vector<16x16x384xbf16>,
    %c0_i32 = arith.constant 0 : i32
    %c2_i32 = arith.constant 2 : i32
    %22 = arith.addi %c0_i32, %c2_i32 : i32
    %c1_i32 = arith.constant 1 : i32
    scf.for %arg10 = %c0_i32 to %22 step %c1_i32  : i32 {
      %c8_i32 = arith.constant 8 : i32
      %23 = arith.muli %arg10, %c8_i32 : i32
      %24 = tpu.assume_multiple %23, 8 : i32
      %25 = arith.index_cast %24 : i32 to index
      %c0_18 = arith.constant 0 : index
      %c0_19 = arith.constant 0 : index
      %26 = vector.load %arg9[%25, %c0_18, %c0_19] : memref<18x16x384xbf16, #tpu.memory_space<vmem>>, vector<8x16x384xbf16>
      %27 = vector.shape_cast %26 : vector<8x16x384xbf16> to vector<128x384xbf16>
      %c0_20 = arith.constant 0 : index
      %c0_21 = arith.constant 0 : index
      %c0_22 = arith.constant 0 : index
      %28 = vector.load %arg4[%c0_20, %c0_21, %c0_22] : memref<3x384x128xbf16, #tpu.memory_space<vmem>>, vector<1x384x128xbf16>
      %29 = vector.shape_cast %28 : vector<1x384x128xbf16> to vector<384x128xbf16>
      %cst_23 = arith.constant dense<0.000000e+00> : vector<128x128xf32>
      %30 = tpu.matmul %27, %29, %cst_23 {dimension_numbers = #tpu.dot_dimension_numbers<[1], [0], [0], [1], [0, 0, 1, 1], [], []>} : vector<128x384xbf16>, vector<384x128xbf16>, vector<128x128xf32> -> vector<128x128xf32>
      %c1_i32_24 = arith.constant 1 : i32
      %31 = arith.addi %24, %c1_i32_24 : i32
      %32 = arith.index_cast %31 : i32 to index
      %c0_25 = arith.constant 0 : index
      %c0_26 = arith.constant 0 : index
      %33 = vector.load %arg9[%32, %c0_25, %c0_26] : memref<18x16x384xbf16, #tpu.memory_space<vmem>>, vector<8x16x384xbf16>
      %34 = vector.shape_cast %33 : vector<8x16x384xbf16> to vector<128x384xbf16>
      %c1_27 = arith.constant 1 : index
      %c0_28 = arith.constant 0 : index
      %c0_29 = arith.constant 0 : index
      %35 = vector.load %arg4[%c1_27, %c0_28, %c0_29] : memref<3x384x128xbf16, #tpu.memory_space<vmem>>, vector<1x384x128xbf16>
      %36 = vector.shape_cast %35 : vector<1x384x128xbf16> to vector<384x128xbf16>
      %cst_30 = arith.constant dense<0.000000e+00> : vector<128x128xf32>
      %37 = tpu.matmul %34, %36, %cst_30 {dimension_numbers = #tpu.dot_dimension_numbers<[1], [0], [0], [1], [0, 0, 1, 1], [], []>} : vector<128x384xbf16>, vector<384x128xbf16>, vector<128x128xf32> -> vector<128x128xf32>
      %38 = arith.addf %30, %37 : vector<128x128xf32>
      %c2_i32_31 = arith.constant 2 : i32
      %39 = arith.addi %24, %c2_i32_31 : i32
      %40 = arith.index_cast %39 : i32 to index
      %c0_32 = arith.constant 0 : index
      %c0_33 = arith.constant 0 : index
      %41 = vector.load %arg9[%40, %c0_32, %c0_33] : memref<18x16x384xbf16, #tpu.memory_space<vmem>>, vector<8x16x384xbf16>
      %42 = vector.shape_cast %41 : vector<8x16x384xbf16> to vector<128x384xbf16>
      %c2 = arith.constant 2 : index
      %c0_34 = arith.constant 0 : index
      %c0_35 = arith.constant 0 : index
      %43 = vector.load %arg4[%c2, %c0_34, %c0_35] : memref<3x384x128xbf16, #tpu.memory_space<vmem>>, vector<1x384x128xbf16>
      %44 = vector.shape_cast %43 : vector<1x384x128xbf16> to vector<384x128xbf16>
      %cst_36 = arith.constant dense<0.000000e+00> : vector<128x128xf32>
      %45 = tpu.matmul %42, %44, %cst_36 {dimension_numbers = #tpu.dot_dimension_numbers<[1], [0], [0], [1], [0, 0, 1, 1], [], []>} : vector<128x384xbf16>, vector<384x128xbf16>, vector<128x128xf32> -> vector<128x128xf32>
      %46 = arith.addf %38, %45 : vector<128x128xf32>
      %c0_37 = arith.constant 0 : index
      %c0_38 = arith.constant 0 : index
      %47 = vector.load %arg5[%c0_37, %c0_38] : memref<1x128xf32, #tpu.memory_space<vmem>>, vector<1x128xf32>
      %48 = vector.broadcast %47 : vector<1x128xf32> to vector<128x128xf32>
      %49 = arith.addf %46, %48 : vector<128x128xf32>
      %cst_39 = arith.constant 0.000000e+00 : f32
      %50 = vector.broadcast %cst_39 : f32 to vector<128x128xf32>
      %51 = arith.maximumf %49, %50 : vector<128x128xf32>
      %52 = arith.truncf %51 : vector<128x128xf32> to vector<128x128xbf16>
      %c0_40 = arith.constant 0 : index
      %c0_41 = arith.constant 0 : index
      %53 = vector.load %arg6[%c0_40, %c0_41] : memref<128x128xbf16, #tpu.memory_space<vmem>>, vector<128x128xbf16>
      %cst_42 = arith.constant dense<0.000000e+00> : vector<128x128xf32>
      %54 = tpu.matmul %52, %53, %cst_42 {dimension_numbers = #tpu.dot_dimension_numbers<[1], [0], [0], [1], [0, 0, 1, 1], [], []>} : vector<128x128xbf16>, vector<128x128xbf16>, vector<128x128xf32> -> vector<128x128xf32>
      %c0_43 = arith.constant 0 : index
      %55 = arith.index_cast %24 : i32 to index
      %c0_44 = arith.constant 0 : index
      %c0_45 = arith.constant 0 : index
      %56 = vector.load %arg1[%c0_43, %55, %c0_44, %c0_45] : memref<1x16x16x128xbf16, #tpu.memory_space<vmem>>, vector<1x8x16x128xbf16>
      %57 = vector.shape_cast %56 : vector<1x8x16x128xbf16> to vector<8x16x128xbf16>
      %58 = vector.shape_cast %57 : vector<8x16x128xbf16> to vector<128x128xbf16>
      %59 = arith.extf %58 : vector<128x128xbf16> to vector<128x128xf32>
      %c0_46 = arith.constant 0 : index
      %c0_47 = arith.constant 0 : index
      %60 = vector.load %arg7[%c0_46, %c0_47] : memref<1x128xf32, #tpu.memory_space<vmem>>, vector<1x128xf32>
      %61 = vector.broadcast %60 : vector<1x128xf32> to vector<128x128xf32>
      %62 = arith.addf %54, %61 : vector<128x128xf32>
      %63 = arith.addf %62, %59 : vector<128x128xf32>
      %cst_48 = arith.constant 0.000000e+00 : f32
      %64 = vector.broadcast %cst_48 : f32 to vector<128x128xf32>
      %65 = arith.maximumf %63, %64 : vector<128x128xf32>
      %66 = vector.shape_cast %65 : vector<128x128xf32> to vector<8x16x128xf32>
      %67 = arith.truncf %66 : vector<8x16x128xf32> to vector<8x16x128xbf16>
      %c0_49 = arith.constant 0 : index
      %68 = arith.index_cast %24 : i32 to index
      %c0_50 = arith.constant 0 : index
      %c0_51 = arith.constant 0 : index
      %69 = vector.load %arg8[%c0_49, %68, %c0_50, %c0_51] : memref<1x16x16x128xbf16, #tpu.memory_space<vmem>>, vector<1x8x16x128xbf16>
      %70 = vector.shape_cast %69 : vector<1x8x16x128xbf16> to vector<8x16x128xbf16>
      %71 = vector.shape_cast %67 : vector<8x16x128xbf16> to vector<1x8x16x128xbf16>
      tpu.vector_store %arg8[%c0_49, %68, %c0_50, %c0_51], %71 {strides = array<i32>} : memref<1x16x16x128xbf16, #tpu.memory_space<vmem>>, vector<1x8x16x128xbf16>,
    }
    %c2_i32_17 = arith.constant 2 : i32
    return
  }
  func.func @transform_0(%arg0: i32) -> (i32, i32, i32, i32) {
    %c0_i32 = arith.constant 0 : i32
    %c0_i32_0 = arith.constant 0 : i32
    %c0_i32_1 = arith.constant 0 : i32
    %c0_i32_2 = arith.constant 0 : i32
    return %arg0, %c0_i32, %c0_i32_0, %c0_i32_1 : i32, i32, i32, i32
  }
  func.func @transform_1(%arg0: i32) -> (i32, i32) {
    %c0_i32 = arith.constant 0 : i32
    %c0_i32_0 = arith.constant 0 : i32
    %c0_i32_1 = arith.constant 0 : i32
    return %c0_i32, %c0_i32_0 : i32, i32
  }
  func.func @transform_2(%arg0: i32) -> (i32, i32) {
    %c0_i32 = arith.constant 0 : i32
    %c0_i32_0 = arith.constant 0 : i32
    %c0_i32_1 = arith.constant 0 : i32
    return %c0_i32, %c0_i32_0 : i32, i32
  }
  func.func @transform_3(%arg0: i32) -> (i32, i32, i32) {
    %c0_i32 = arith.constant 0 : i32
    %c0_i32_0 = arith.constant 0 : i32
    %c0_i32_1 = arith.constant 0 : i32
    %c0_i32_2 = arith.constant 0 : i32
    return %c0_i32, %c0_i32_0, %c0_i32_1 : i32, i32, i32
  }
  func.func @transform_4(%arg0: i32) -> (i32, i32) {
    %c0_i32 = arith.constant 0 : i32
    %c0_i32_0 = arith.constant 0 : i32
    %c0_i32_1 = arith.constant 0 : i32
    return %c0_i32, %c0_i32_0 : i32, i32
  }
  func.func @transform_5(%arg0: i32) -> (i32, i32) {
    %c0_i32 = arith.constant 0 : i32
    %c0_i32_0 = arith.constant 0 : i32
    %c0_i32_1 = arith.constant 0 : i32
    return %c0_i32, %c0_i32_0 : i32, i32
  }
  func.func @transform_6(%arg0: i32) -> (i32, i32) {
    %c0_i32 = arith.constant 0 : i32
    %c0_i32_0 = arith.constant 0 : i32
    %c0_i32_1 = arith.constant 0 : i32
    return %c0_i32, %c0_i32_0 : i32, i32
  }
  func.func @transform_7(%arg0: i32) -> (i32, i32, i32, i32) {
    %c0_i32 = arith.constant 0 : i32
    %c0_i32_0 = arith.constant 0 : i32
    %c0_i32_1 = arith.constant 0 : i32
    %c0_i32_2 = arith.constant 0 : i32
    return %arg0, %c0_i32, %c0_i32_0, %c0_i32_1 : i32, i32, i32, i32
  }
}

</mosaic_0001>

<llo_original>
// kernel: tpu_custom_call.1
$region0: #{tpu_custom_call.1}
  #allocation0 [shape = 'u32[]', space=smem, size = 0x4, offset = 0x4, fixed_abs, tag = 'smem constant byte address 0x4 - core index']
  #allocation1 [shape = 'u32[144,128]{1,0:T(1,128)}', space=vmem, size = 0x12000, scoped, tag = 'internal scratch']
  #allocation2 [shape = 'bf16[18,16,384]{2,1,0:T(16,128)(2,1)}', space=vmem, size = 0x36000, scoped, tag = 'scratch operand']
  %s0 = inlined_call_operand.hbm [shape: bf16[2,16,16,128], index: 0, kind: input, shape index: {}]
  %s1 = inlined_call_operand.hbm [shape: bf16[128,128], index: 1, kind: input, shape index: {}]
  %s2 = inlined_call_operand.vmem [shape: f32[1,128], index: 2, kind: input, shape index: {}]
  %s3 = inlined_call_operand.hbm [shape: bf16[3,384,128], index: 3, kind: input, shape index: {}]
  %s4 = inlined_call_operand.vmem [shape: f32[1,128], index: 4, kind: input, shape index: {}]
  %s5 = inlined_call_operand.hbm [shape: bf16[128,128], index: 5, kind: input, shape index: {}]
  %s6 = inlined_call_operand.vmem [shape: f32[1,128], index: 6, kind: input, shape index: {}]
  %s7 = inlined_call_operand.hbm [shape: bf16[2,16,16,128], index: 7, kind: output, shape index: {}]
  %s8 = sld [smem:[#allocation0]]
  $region84: #{tpu_custom_call.1} parent=0
    _
  %s10 = ssub.s32 1, %s8
  %s11 = scalar_select 0, %s10, %s8
  $region1: #{tpu_custom_call.1} parent=0
    #allocation3 [shape = 'u8[131072]{0}', space=vmem, size = 0x20000, scoped, tag = 'input window, operand 0']
    #allocation4 [shape = 's32[2]{0}', space=sflag, size = 0x8, scoped, tag = 'scoped memory for tpu_custom_call.1']
    #allocation5 [shape = 's32[2]{0}', space=sflag, size = 0x8, scoped, tag = 'scoped memory for tpu_custom_call.1']
    #allocation6 [shape = 'u8[32768]{0}', space=vmem, size = 0x8000, scoped, tag = 'input window, operand 1, single buffered']
    #allocation7 [shape = 's32[1]{0}', space=sflag, size = 0x4, scoped, tag = 'scoped memory for tpu_custom_call.1']
    #allocation8 [shape = 'u8[294912]{0}', space=vmem, size = 0x48000, scoped, tag = 'input window, operand 3, single buffered']
    #allocation9 [shape = 'u8[32768]{0}', space=vmem, size = 0x8000, scoped, tag = 'input window, operand 5, single buffered']
    #allocation10 [shape = 's32[1]{0}', space=sflag, size = 0x4, scoped, tag = 'scoped memory for tpu_custom_call.1']
    #allocation11 [shape = 'u8[131072]{0}', space=vmem, size = 0x20000, scoped, tag = 'output window, operand 0']
    %12 = vsyncpa [#allocation4], 0
    %s13 = scalar_lea.sflag [#allocation4], 1
    %14 = vsyncpa %s13, 0
    %15 = vsyncpa [#allocation7], 0
    %16 = vsyncpa [#allocation10], 0
    %17 = vsyncpa [#allocation5], 0
    %s18 = scalar_lea.sflag [#allocation5], 1
    %19 = vsyncpa %s18, 0
    loop: start=0, step=1, limit=4
    $region2: #{tpu_custom_call.1} parent=1 // loop_pre_header
      _
    $region3: #{tpu_custom_call.1} parent=1 // loop_header
      %s21 = sphi 0, %s25
      %p22 = scmp.ge.s32.totalorder %s21, 4
      %s31 = sphi 0, %s33
      %s34 = sphi 0, %s31
      %s35 = sphi 0, %s34
      %s51 = sphi 0, %s35
      %s55 = sphi 0, %s55
      %s57 = sphi 0, %s55
      %s58 = sphi 0, %s57
      %s72 = sphi 0, %s58
      %s76 = sphi 0, %s76
      %s78 = sphi 0, %s76
      %s79 = sphi 0, %s78
      %s93 = sphi 0, %s79
      %s97 = sphi 0, %s97
      %s99 = sphi 0, %s97
      %s100 = sphi 0, %s99
      %s114 = sphi 0, %s100
      %s118 = sphi 0, %s118
      %s120 = sphi 0, %s118
      %s121 = sphi 0, %s120
      %s135 = sphi 0, %s121
      %s139 = sphi 0, %s139
      %s141 = sphi 0, %s139
      %s142 = sphi 0, %s141
      %s156 = sphi 0, %s142
      %s160 = sphi 0, %s160
      %s162 = sphi 0, %s160
      %s163 = sphi 0, %s162
      %s177 = sphi 0, %s163
      %s183 = sphi 0, %s185
      %s186 = sphi 0, %s183
      %s187 = sphi 0, %s186
      %s203 = sphi 0, %s187
    $region4: #{tpu_custom_call.1} parent=1 // loop_header_branch
      %24 = sbr.rel (%p22) target = $region8
    $region5: #{tpu_custom_call.1} parent=1 // loop_body
      %s26 = ssub.s32 %s21, 1
      %s27 = ssub.s32 %s21, 2
      %s28 = sadd.s32 %s21, 1
      %s29 = ssub.s32 %s21, %s28
      %p30 = scmp.eq.s32.totalorder %s29, 0
      %s32 = sadd.s32 %s31, 1
      %s33 = scalar_select %p30, %s31, %s32
      %p36 = pneg %p30
      %p37 = scmp.eq.s32.totalorder %s21, 1
      %p38 = por %p36, %p37
      %p39 = scmp.ne.s32.totalorder %s31, %s34
      %p40 = scmp.eq.s32.totalorder %s21, 0
      %p41 = por %p39, %p40
      %p42 = scmp.ne.s32.totalorder %s31, %s34
      %p43 = scmp.eq.s32.totalorder %s26, 1
      %p44 = por %p42, %p43
      %p45 = scmp.ne.s32.totalorder %s34, %s35
      %p46 = scmp.eq.s32.totalorder %s26, 0
      %p47 = por %p45, %p46
      %p48 = scmp.ne.s32.totalorder %s34, %s35
      %p49 = scmp.eq.s32.totalorder %s27, 1
      %p50 = por %p48, %p49
      %p52 = scmp.ne.s32.totalorder %s35, %s51
      %p53 = scmp.eq.s32.totalorder %s27, 0
      %p54 = por %p52, %p53
      %s56 = sadd.s32 %s55, 1
      %p59 = scmp.eq.s32.totalorder %s21, 1
      %p60 = scmp.ne.s32.totalorder %s55, %s57
      %p61 = scmp.eq.s32.totalorder %s21, 0
      %p62 = por %p60, %p61
      %p63 = scmp.ne.s32.totalorder %s55, %s57
      %p64 = scmp.eq.s32.totalorder %s26, 1
      %p65 = por %p63, %p64
      %p66 = scmp.ne.s32.totalorder %s57, %s58
      %p67 = scmp.eq.s32.totalorder %s26, 0
      %p68 = por %p66, %p67
      %p69 = scmp.ne.s32.totalorder %s57, %s58
      %p70 = scmp.eq.s32.totalorder %s27, 1
      %p71 = por %p69, %p70
      %p73 = scmp.ne.s32.totalorder %s58, %s72
      %p74 = scmp.eq.s32.totalorder %s27, 0
      %p75 = por %p73, %p74
      %s77 = sadd.s32 %s76, 1
      %p80 = scmp.eq.s32.totalorder %s21, 1
      %p81 = scmp.ne.s32.totalorder %s76, %s78
      %p82 = scmp.eq.s32.totalorder %s21, 0
      %p83 = por %p81, %p82
      %p84 = scmp.ne.s32.totalorder %s76, %s78
      %p85 = scmp.eq.s32.totalorder %s26, 1
      %p86 = por %p84, %p85
      %p87 = scmp.ne.s32.totalorder %s78, %s79
      %p88 = scmp.eq.s32.totalorder %s26, 0
      %p89 = por %p87, %p88
      %p90 = scmp.ne.s32.totalorder %s78, %s79
      %p91 = scmp.eq.s32.totalorder %s27, 1
      %p92 = por %p90, %p91
      %p94 = scmp.ne.s32.totalorder %s79, %s93
      %p95 = scmp.eq.s32.totalorder %s27, 0
      %p96 = por %p94, %p95
      %s98 = sadd.s32 %s97, 1
      %p101 = scmp.eq.s32.totalorder %s21, 1
      %p102 = scmp.ne.s32.totalorder %s97, %s99
      %p103 = scmp.eq.s32.totalorder %s21, 0
      %p104 = por %p102, %p103
      %p105 = scmp.ne.s32.totalorder %s97, %s99
      %p106 = scmp.eq.s32.totalorder %s26, 1
      %p107 = por %p105, %p106
      %p108 = scmp.ne.s32.totalorder %s99, %s100
      %p109 = scmp.eq.s32.totalorder %s26, 0
      %p110 = por %p108, %p109
      %p111 = scmp.ne.s32.totalorder %s99, %s100
      %p112 = scmp.eq.s32.totalorder %s27, 1
      %p113 = por %p111, %p112
      %p115 = scmp.ne.s32.totalorder %s100, %s114
      %p116 = scmp.eq.s32.totalorder %s27, 0
      %p117 = por %p115, %p116
      %s119 = sadd.s32 %s118, 1
      %p122 = scmp.eq.s32.totalorder %s21, 1
      %p123 = scmp.ne.s32.totalorder %s118, %s120
      %p124 = scmp.eq.s32.totalorder %s21, 0
      %p125 = por %p123, %p124
      %p126 = scmp.ne.s32.totalorder %s118, %s120
      %p127 = scmp.eq.s32.totalorder %s26, 1
      %p128 = por %p126, %p127
      %p129 = scmp.ne.s32.totalorder %s120, %s121
      %p130 = scmp.eq.s32.totalorder %s26, 0
      %p131 = por %p129, %p130
      %p132 = scmp.ne.s32.totalorder %s120, %s121
      %p133 = scmp.eq.s32.totalorder %s27, 1
      %p134 = por %p132, %p133
      %p136 = scmp.ne.s32.totalorder %s121, %s135
      %p137 = scmp.eq.s32.totalorder %s27, 0
      %p138 = por %p136, %p137
      %s140 = sadd.s32 %s139, 1
      %p143 = scmp.eq.s32.totalorder %s21, 1
      %p144 = scmp.ne.s32.totalorder %s139, %s141
      %p145 = scmp.eq.s32.totalorder %s21, 0
      %p146 = por %p144, %p145
      %p147 = scmp.ne.s32.totalorder %s139, %s141
      %p148 = scmp.eq.s32.totalorder %s26, 1
      %p149 = por %p147, %p148
      %p150 = scmp.ne.s32.totalorder %s141, %s142
      %p151 = scmp.eq.s32.totalorder %s26, 0
      %p152 = por %p150, %p151
      %p153 = scmp.ne.s32.totalorder %s141, %s142
      %p154 = scmp.eq.s32.totalorder %s27, 1
      %p155 = por %p153, %p154
      %p157 = scmp.ne.s32.totalorder %s142, %s156
      %p158 = scmp.eq.s32.totalorder %s27, 0
      %p159 = por %p157, %p158
      %s161 = sadd.s32 %s160, 1
      %p164 = scmp.eq.s32.totalorder %s21, 1
      %p165 = scmp.ne.s32.totalorder %s160, %s162
      %p166 = scmp.eq.s32.totalorder %s21, 0
      %p167 = por %p165, %p166
      %p168 = scmp.ne.s32.totalorder %s160, %s162
      %p169 = scmp.eq.s32.totalorder %s26, 1
      %p170 = por %p168, %p169
      %p171 = scmp.ne.s32.totalorder %s162, %s163
      %p172 = scmp.eq.s32.totalorder %s26, 0
      %p173 = por %p171, %p172
      %p174 = scmp.ne.s32.totalorder %s162, %s163
      %p175 = scmp.eq.s32.totalorder %s27, 1
      %p176 = por %p174, %p175
      %p178 = scmp.ne.s32.totalorder %s163, %s177
      %p179 = scmp.eq.s32.totalorder %s27, 0
      %p180 = por %p178, %p179
      %s181 = ssub.s32 %s21, %s28
      %p182 = scmp.eq.s32.totalorder %s181, 0
      %s184 = sadd.s32 %s183, 1
      %s185 = scalar_select %p182, %s183, %s184
      %p188 = pneg %p182
      %p189 = scmp.eq.s32.totalorder %s21, 1
      %p190 = por %p188, %p189
      %p191 = scmp.ne.s32.totalorder %s183, %s186
      %p192 = scmp.eq.s32.totalorder %s21, 0
      %p193 = por %p191, %p192
      %p194 = scmp.ne.s32.totalorder %s183, %s186
      %p195 = scmp.eq.s32.totalorder %s26, 1
      %p196 = por %p194, %p195
      %p197 = scmp.ne.s32.totalorder %s186, %s187
      %p198 = scmp.eq.s32.totalorder %s26, 0
      %p199 = por %p197, %p198
      %p200 = scmp.ne.s32.totalorder %s186, %s187
      %p201 = scmp.eq.s32.totalorder %s27, 1
      %p202 = por %p200, %p201
      %p204 = scmp.ne.s32.totalorder %s187, %s203
      %p205 = scmp.eq.s32.totalorder %s27, 0
      %p206 = por %p204, %p205
      %p207 = scmp.le.s32.totalorder 1, %s21
      %p208 = scmp.lt.s32.totalorder %s21, 3
      %p209 = pnand %p207, %p208
      %p210 = pneg %p209
      // Predicated region
      $region9: #{tpu_custom_call.1} parent=5 // pred_check
        _
      $region10: #{tpu_custom_call.1} parent=5 // pred_check_branch
        %212 = sbr.rel (%p209) target = $region12
      $region11: #{tpu_custom_call.1} parent=5 // pred_region
        %s213 = ssub.s32 %s21, 1
        // Predicated region
        $region13: #{tpu_custom_call.1} parent=11 // pred_check
          %p214 = pneg %p68
        $region14: #{tpu_custom_call.1} parent=11 // pred_check_branch
          %216 = sbr.rel (%p214) target = $region16
        $region15: #{tpu_custom_call.1} parent=11 // pred_region
          %s218 = ssub.s32 1024, 1024
          %219 = vsyncadd [#allocation7], %s218
          %s220 = sshll.u32 [#allocation6], 4
          %s221 = int_to_ptr.vmem [resolvable:$true] %s220
          %226 = dma.hbm_to_vmem [thread:$0]  %s1, 1024, %s221, [#allocation7], 64, 64, 4
        $region16: #{tpu_custom_call.1} parent=11 // pred_fallthru
          _
        // Predicated region
        $region17: #{tpu_custom_call.1} parent=11 // pred_check
          %p227 = pneg %p89
        $region18: #{tpu_custom_call.1} parent=11 // pred_check_branch
          %229 = sbr.rel (%p227) target = $region20
        $region19: #{tpu_custom_call.1} parent=11 // pred_region
          _
        $region20: #{tpu_custom_call.1} parent=11 // pred_fallthru
          _
        // Predicated region
        $region21: #{tpu_custom_call.1} parent=11 // pred_check
          %p230 = pneg %p110
        $region22: #{tpu_custom_call.1} parent=11 // pred_check_branch
          %232 = sbr.rel (%p230) target = $region24
        $region23: #{tpu_custom_call.1} parent=11 // pred_region
          %s234 = ssub.s32 9216, 9216
          %235 = vsyncadd [#allocation7], %s234
          %s236 = sshll.u32 [#allocation8], 4
          %s237 = int_to_ptr.vmem [resolvable:$true] %s236
          %242 = dma.hbm_to_vmem [thread:$0]  %s3, 9216, %s237, [#allocation7], 64, 64, 4
        $region24: #{tpu_custom_call.1} parent=11 // pred_fallthru
          _
        // Predicated region
        $region25: #{tpu_custom_call.1} parent=11 // pred_check
          %p243 = pneg %p131
        $region26: #{tpu_custom_call.1} parent=11 // pred_check_branch
          %245 = sbr.rel (%p243) target = $region28
        $region27: #{tpu_custom_call.1} parent=11 // pred_region
          _
        $region28: #{tpu_custom_call.1} parent=11 // pred_fallthru
          _
        // Predicated region
        $region29: #{tpu_custom_call.1} parent=11 // pred_check
          %p246 = pneg %p152
        $region30: #{tpu_custom_call.1} parent=11 // pred_check_branch
          %248 = sbr.rel (%p246) target = $region32
        $region31: #{tpu_custom_call.1} parent=11 // pred_region
          %s250 = ssub.s32 1024, 1024
          %251 = vsyncadd [#allocation10], %s250
          %s252 = sshll.u32 [#allocation9], 4
          %s253 = int_to_ptr.vmem [resolvable:$true] %s252
          %258 = dma.hbm_to_vmem [thread:$0]  %s5, 1024, %s253, [#allocation10], 64, 64, 4
        $region32: #{tpu_custom_call.1} parent=11 // pred_fallthru
          _
        // Predicated region
        $region33: #{tpu_custom_call.1} parent=11 // pred_check
          %p259 = pneg %p173
        $region34: #{tpu_custom_call.1} parent=11 // pred_check_branch
          %261 = sbr.rel (%p259) target = $region36
        $region35: #{tpu_custom_call.1} parent=11 // pred_region
          _
        $region36: #{tpu_custom_call.1} parent=11 // pred_fallthru
          _
      $region12: #{tpu_custom_call.1} parent=5 // pred_fallthru
        _
      %p262 = scmp.lt.s32.totalorder %s21, 2
      // Predicated region
      $region37: #{tpu_custom_call.1} parent=5 // pred_check
        %p263 = pneg %p262
      $region38: #{tpu_custom_call.1} parent=5 // pred_check_branch
        %265 = sbr.rel (%p263) target = $region40
      $region39: #{tpu_custom_call.1} parent=5 // pred_region
        // Predicated region
        $region41: #{tpu_custom_call.1} parent=39 // pred_check
          %p266 = pneg %p41
        $region42: #{tpu_custom_call.1} parent=39 // pred_check_branch
          %268 = sbr.rel (%p266) target = $region44
        $region43: #{tpu_custom_call.1} parent=39 // pred_region
          %s269 = sand.u32 %s31, 1
          %s270 = scalar_lea.sflag [#allocation4], %s269
          %s271 = sand.u32 %s31, 1
          %s272 = smul.addr %s271, 128
          %s273 = scalar_lea.vmem [#allocation3], %s272
          %s275 = ssub.s32 2048, 2048
          %276 = vsyncadd %s270, %s275
          %s277 = smul.addr %s21, 32
          %s278 = smul.addr %s277, 64
          %s279 = scalar_lea.hbm %s0, %s278
          %s280 = sshll.u32 %s273, 4
          %s281 = int_to_ptr.vmem [resolvable:$true] %s280
          %286 = dma.hbm_to_vmem [thread:$0]  %s279, 2048, %s281, %s270, 64, 64, 4
        $region44: #{tpu_custom_call.1} parent=39 // pred_fallthru
          _
      $region40: #{tpu_custom_call.1} parent=5 // pred_fallthru
        _
      %p287 = scmp.le.s32.totalorder 1, %s21
      %p288 = scmp.lt.s32.totalorder %s21, 3
      %p289 = pnand %p287, %p288
      %p290 = pneg %p289
      // Predicated region
      $region45: #{tpu_custom_call.1} parent=5 // pred_check
        _
      $region46: #{tpu_custom_call.1} parent=5 // pred_check_branch
        %292 = sbr.rel (%p289) target = $region48
      $region47: #{tpu_custom_call.1} parent=5 // pred_region
        %s293 = ssub.s32 %s21, 1
        %s294 = sand.u32 %s34, 1
        %s295 = scalar_lea.sflag [#allocation4], %s294
        %s296 = sand.u32 %s34, 1
        %s297 = smul.addr %s296, 128
        %s298 = scalar_lea.vmem [#allocation3], %s297
        // Predicated region
        $region49: #{tpu_custom_call.1} parent=47 // pred_check
          %p299 = pneg %p47
        $region50: #{tpu_custom_call.1} parent=47 // pred_check_branch
          %301 = sbr.rel (%p299) target = $region52
        $region51: #{tpu_custom_call.1} parent=47 // pred_region
          %302 = dma.done %s295, 2048
        $region52: #{tpu_custom_call.1} parent=47 // pred_fallthru
          _
        // Predicated region
        $region53: #{tpu_custom_call.1} parent=47 // pred_check
          %p303 = pneg %p68
        $region54: #{tpu_custom_call.1} parent=47 // pred_check_branch
          %305 = sbr.rel (%p303) target = $region56
        $region55: #{tpu_custom_call.1} parent=47 // pred_region
          %306 = dma.done [#allocation7], 1024
        $region56: #{tpu_custom_call.1} parent=47 // pred_fallthru
          _
        // Predicated region
        $region57: #{tpu_custom_call.1} parent=47 // pred_check
          %p307 = pneg %p110
        $region58: #{tpu_custom_call.1} parent=47 // pred_check_branch
          %309 = sbr.rel (%p307) target = $region60
        $region59: #{tpu_custom_call.1} parent=47 // pred_region
          %310 = dma.done [#allocation7], 9216
        $region60: #{tpu_custom_call.1} parent=47 // pred_fallthru
          _
        // Predicated region
        $region61: #{tpu_custom_call.1} parent=47 // pred_check
          %p311 = pneg %p152
        $region62: #{tpu_custom_call.1} parent=47 // pred_check_branch
          %313 = sbr.rel (%p311) target = $region64
        $region63: #{tpu_custom_call.1} parent=47 // pred_region
          %314 = dma.done [#allocation10], 1024
        $region64: #{tpu_custom_call.1} parent=47 // pred_fallthru
          _
        %s315 = sand.u32 %s34, 1
        %s316 = scalar_lea.sflag [#allocation4], %s315
        %s317 = sand.u32 %s34, 1
        %s318 = smul.addr %s317, 128
        %s319 = scalar_lea.vmem [#allocation3], %s318
        %p320 = pneg %p47
        %p321 = pneg %p44
        %p322 = pneg %p68
        %p323 = pneg %p65
        %p324 = pneg %p89
        %p325 = pneg %p86
        %p326 = pneg %p110
        %p327 = pneg %p107
        %p328 = pneg %p131
        %p329 = pneg %p128
        %p330 = pneg %p152
        %p331 = pneg %p149
        %p332 = pneg %p173
        %p333 = pneg %p170
        %p334 = pneg %p199
        %p335 = pneg %p196
        %s336 = sand.u32 %s186, 1
        %s337 = scalar_lea.sflag [#allocation5], %s336
        %s338 = sand.u32 %s186, 1
        %s339 = smul.addr %s338, 128
        %s340 = scalar_lea.vmem [#allocation11], %s339
        %v342 = vld [vmem:[%s298] sm:$0xf]
        %v343 = vld [vmem:[%s298 + $0x4] sm:$0xf]
        %v344 = vld [vmem:[%s298 + $0x8] sm:$0xf]
        %v345 = vld [vmem:[%s298 + $0xc] sm:$0xf]
        %v346 = vld [vmem:[%s298 + $0x10] sm:$0xf]
        %v347 = vld [vmem:[%s298 + $0x14] sm:$0xf]
        %v348 = vld [vmem:[%s298 + $0x18] sm:$0xf]
        %v349 = vld [vmem:[%s298 + $0x1c] sm:$0xf]
        %v350 = vld [vmem:[%s298 + $0x20] sm:$0xf]
        %v351 = vld [vmem:[%s298 + $0x24] sm:$0xf]
        %v352 = vld [vmem:[%s298 + $0x28] sm:$0xf]
        %v353 = vld [vmem:[%s298 + $0x2c] sm:$0xf]
        %v354 = vld [vmem:[%s298 + $0x30] sm:$0xf]
        %v355 = vld [vmem:[%s298 + $0x34] sm:$0xf]
        %v356 = vld [vmem:[%s298 + $0x38] sm:$0xf]
        %v357 = vld [vmem:[%s298 + $0x3c] sm:$0xf]
        %v358 = vld [vmem:[%s298 + $0x40] sm:$0xf]
        %v359 = vld [vmem:[%s298 + $0x44] sm:$0xf]
        %v360 = vld [vmem:[%s298 + $0x48] sm:$0xf]
        %v361 = vld [vmem:[%s298 + $0x4c] sm:$0xf]
        %v362 = vld [vmem:[%s298 + $0x50] sm:$0xf]
        %v363 = vld [vmem:[%s298 + $0x54] sm:$0xf]
        %v364 = vld [vmem:[%s298 + $0x58] sm:$0xf]
        %v365 = vld [vmem:[%s298 + $0x5c] sm:$0xf]
        %v366 = vld [vmem:[%s298 + $0x60] sm:$0xf]
        %v367 = vld [vmem:[%s298 + $0x64] sm:$0xf]
        %v368 = vld [vmem:[%s298 + $0x68] sm:$0xf]
        %v369 = vld [vmem:[%s298 + $0x6c] sm:$0xf]
        %v370 = vld [vmem:[%s298 + $0x70] sm:$0xf]
        %v371 = vld [vmem:[%s298 + $0x74] sm:$0xf]
        %v372 = vld [vmem:[%s298 + $0x78] sm:$0xf]
        %v373 = vld [vmem:[%s298 + $0x7c] sm:$0xf]
        %v374 = vld [vmem:[#allocation6] sm:$0xf]
        %v375 = vld [vmem:[#allocation6 + $0x4] sm:$0xf]
        %v376 = vld [vmem:[#allocation6 + $0x8] sm:$0xf]
        %v377 = vld [vmem:[#allocation6 + $0xc] sm:$0xf]
        %v378 = vld [vmem:[#allocation6 + $0x10] sm:$0xf]
        %v379 = vld [vmem:[#allocation6 + $0x14] sm:$0xf]
        %v380 = vld [vmem:[#allocation6 + $0x18] sm:$0xf]
        %v381 = vld [vmem:[#allocation6 + $0x1c] sm:$0xf]
        %v382 = vld [vmem:[#allocation6 + $0x20] sm:$0xf]
        %v383 = vld [vmem:[#allocation6 + $0x24] sm:$0xf]
        %v384 = vld [vmem:[#allocation6 + $0x28] sm:$0xf]
        %v385 = vld [vmem:[#allocation6 + $0x2c] sm:$0xf]
        %v386 = vld [vmem:[#allocation6 + $0x30] sm:$0xf]
        %v387 = vld [vmem:[#allocation6 + $0x34] sm:$0xf]
        %v388 = vld [vmem:[#allocation6 + $0x38] sm:$0xf]
        %v389 = vld [vmem:[#allocation6 + $0x3c] sm:$0xf]
        %v390 = vld [vmem:[%s2] sm:$0x1]
        %v392 = vlaneseq
        %v393 = vshrl.u32 %v392, 7
        %v394 = vsub.s32 0, %v393
        %v395 = vrot.slane %v390, %v394
        %v429 = vunpack.c.l.b16 %v342
        %v430 = vunpack.c.l.b16 %v343
        %v431 = vunpack.c.l.b16 %v344
        %v432 = vunpack.c.l.b16 %v345
        %v433 = vunpack.c.l.b16 %v346
        %v434 = vunpack.c.l.b16 %v347
        %v435 = vunpack.c.l.b16 %v348
        %v436 = vunpack.c.l.b16 %v349
        %v437 = vunpack.c.l.b16 %v350
        %v438 = vunpack.c.l.b16 %v351
        %v439 = vunpack.c.l.b16 %v352
        %v440 = vunpack.c.l.b16 %v353
        %v441 = vunpack.c.l.b16 %v354
        %v442 = vunpack.c.l.b16 %v355
        %v443 = vunpack.c.l.b16 %v356
        %v444 = vunpack.c.l.b16 %v357
        %v445 = vunpack.c.l.b16 %v358
        %v446 = vunpack.c.l.b16 %v359
        %v447 = vunpack.c.l.b16 %v360
        %v448 = vunpack.c.l.b16 %v361
        %v449 = vunpack.c.l.b16 %v362
        %v450 = vunpack.c.l.b16 %v363
        %v451 = vunpack.c.l.b16 %v364
        %v452 = vunpack.c.l.b16 %v365
        %v453 = vunpack.c.l.b16 %v366
        %v454 = vunpack.c.l.b16 %v367
        %v455 = vunpack.c.l.b16 %v368
        %v456 = vunpack.c.l.b16 %v369
        %v457 = vunpack.c.l.b16 %v370
        %v458 = vunpack.c.l.b16 %v371
        %v459 = vunpack.c.l.b16 %v372
        %v460 = vunpack.c.l.b16 %v373
        %v461 = vpack.c.b16 %v430, %v429
        %v462 = vpack.c.b16 %v432, %v431
        %v463 = vpack.c.b16 %v434, %v433
        %v464 = vpack.c.b16 %v436, %v435
        %v465 = vpack.c.b16 %v438, %v437
        %v466 = vpack.c.b16 %v440, %v439
        %v467 = vpack.c.b16 %v442, %v441
        %v468 = vpack.c.b16 %v444, %v443
        %v469 = vpack.c.b16 %v446, %v445
        %v470 = vpack.c.b16 %v448, %v447
        %v471 = vpack.c.b16 %v450, %v449
        %v472 = vpack.c.b16 %v452, %v451
        %v473 = vpack.c.b16 %v454, %v453
        %v474 = vpack.c.b16 %v456, %v455
        %v475 = vpack.c.b16 %v458, %v457
        %v476 = vpack.c.b16 %v460, %v459
        %v509 = vunpack.c.l.b16 %v374
        %v510 = vunpack.c.l.b16 %v375
        %v511 = vunpack.c.l.b16 %v376
        %v512 = vunpack.c.l.b16 %v377
        %v513 = vunpack.c.l.b16 %v378
        %v514 = vunpack.c.l.b16 %v379
        %v515 = vunpack.c.l.b16 %v380
        %v516 = vunpack.c.l.b16 %v381
        %v517 = vunpack.c.l.b16 %v382
        %v518 = vunpack.c.l.b16 %v383
        %v519 = vunpack.c.l.b16 %v384
        %v520 = vunpack.c.l.b16 %v385
        %v521 = vunpack.c.l.b16 %v386
        %v522 = vunpack.c.l.b16 %v387
        %v523 = vunpack.c.l.b16 %v388
        %v524 = vunpack.c.l.b16 %v389
        %v525 = vpack.c.b16 %v510, %v509
        %v526 = vpack.c.b16 %v512, %v511
        %v527 = vpack.c.b16 %v514, %v513
        %v528 = vpack.c.b16 %v516, %v515
        %v529 = vpack.c.b16 %v518, %v517
        %v530 = vpack.c.b16 %v520, %v519
        %v531 = vpack.c.b16 %v522, %v521
        %v532 = vpack.c.b16 %v524, %v523
        %541 = vmatprep.subr.bf16.mxu0 0
        %542 = vmatpush1.bf16.msra.mxu0 %v525
        %543 = vmatprep.subr.bf16.mxu0 0
        %544 = vmatpush1.bf16.msra.mxu0 %v526
        %545 = vmatprep.subr.bf16.mxu0 0
        %546 = vmatpush1.bf16.msra.mxu0 %v527
        %547 = vmatprep.subr.bf16.mxu0 0
        %548 = vmatpush1.bf16.msra.mxu0 %v528
        %549 = vmatprep.subr.bf16.mxu0 0
        %550 = vmatpush1.bf16.msra.mxu0 %v529
        %551 = vmatprep.subr.bf16.mxu0 0
        %552 = vmatpush1.bf16.msra.mxu0 %v530
        %553 = vmatprep.subr.bf16.mxu0 0
        %554 = vmatpush1.bf16.msra.mxu0 %v531
        %555 = vmatprep.subr.bf16.mxu0 0
        %556 = vmatpush1.bf16.msra.mxu0 %v532
        %557 = vmatprep.subr.bf16.mxu0 0
        %558 = vmatpush1.bf16.msra.mxu0 0
        %559 = vmatprep.subr.bf16.mxu0 0
        %560 = vmatpush1.bf16.msra.mxu0 0
        %561 = vmatprep.subr.bf16.mxu0 0
        %562 = vmatpush1.bf16.msra.mxu0 0
        %563 = vmatprep.subr.bf16.mxu0 0
        %564 = vmatpush1.bf16.msra.mxu0 0
        %565 = vmatprep.subr.bf16.mxu0 0
        %566 = vmatpush1.bf16.msra.mxu0 0
        %567 = vmatprep.subr.bf16.mxu0 0
        %568 = vmatpush1.bf16.msra.mxu0 0
        %569 = vmatprep.subr.bf16.mxu0 0
        %570 = vmatpush1.bf16.msra.mxu0 0
        %571 = vmatprep.subr.bf16.mxu0 0
        %572 = vmatpush1.bf16.msra.mxu0 0
        %573 = vmatprep.mubr.bf16.mxu0 0
        %574 = vmatmul.mubr.bf16.gmra.mrb[0].mxu0 %v461
        %v575 = vpop.f32.mrb[0].mxu0
        %v576 = vadd.f32 %v395, %v575
        %v577 = vpop.f32.mrb[0].mxu0
        %v578 = vpop.f32.mrb[0].mxu0
        %v579 = vadd.f32 %v395, %v578
        %v580 = vpop.f32.mrb[0].mxu0
        %581 = vmatprep.mubr.bf16.mxu0 0
        %582 = vmatmul.mubr.bf16.gmra.mrb[0].mxu0 %v462
        %v583 = vpop.f32.mrb[0].mxu0
        %v584 = vadd.f32 %v395, %v583
        %v585 = vpop.f32.mrb[0].mxu0
        %v586 = vpop.f32.mrb[0].mxu0
        %v587 = vadd.f32 %v395, %v586
        %v588 = vpop.f32.mrb[0].mxu0
        %589 = vmatprep.mubr.bf16.mxu0 0
        %590 = vmatmul.mubr.bf16.gmra.mrb[0].mxu0 %v463
        %v591 = vpop.f32.mrb[0].mxu0
        %v592 = vadd.f32 %v395, %v591
        %v593 = vpop.f32.mrb[0].mxu0
        %v594 = vpop.f32.mrb[0].mxu0
        %v595 = vadd.f32 %v395, %v594
        %v596 = vpop.f32.mrb[0].mxu0
        %597 = vmatprep.mubr.bf16.mxu0 0
        %598 = vmatmul.mubr.bf16.gmra.mrb[0].mxu0 %v464
        %v599 = vpop.f32.mrb[0].mxu0
        %v600 = vadd.f32 %v395, %v599
        %v601 = vpop.f32.mrb[0].mxu0
        %v602 = vpop.f32.mrb[0].mxu0
        %v603 = vadd.f32 %v395, %v602
        %v604 = vpop.f32.mrb[0].mxu0
        %605 = vmatprep.mubr.bf16.mxu0 0
        %606 = vmatmul.mubr.bf16.gmra.mrb[0].mxu0 %v465
        %v607 = vpop.f32.mrb[0].mxu0
        %v608 = vadd.f32 %v395, %v607
        %v609 = vpop.f32.mrb[0].mxu0
        %v610 = vpop.f32.mrb[0].mxu0
        %v611 = vadd.f32 %v395, %v610
        %v612 = vpop.f32.mrb[0].mxu0
        %613 = vmatprep.mubr.bf16.mxu0 0
        %614 = vmatmul.mubr.bf16.gmra.mrb[0].mxu0 %v466
        %v615 = vpop.f32.mrb[0].mxu0
        %v616 = vadd.f32 %v395, %v615
        %v617 = vpop.f32.mrb[0].mxu0
        %v618 = vpop.f32.mrb[0].mxu0
        %v619 = vadd.f32 %v395, %v618
        %v620 = vpop.f32.mrb[0].mxu0
        %621 = vmatprep.mubr.bf16.mxu0 0
        %622 = vmatmul.mubr.bf16.gmra.mrb[0].mxu0 %v467
        %v623 = vpop.f32.mrb[0].mxu0
        %v624 = vadd.f32 %v395, %v623
        %v625 = vpop.f32.mrb[0].mxu0
        %v626 = vpop.f32.mrb[0].mxu0
        %v627 = vadd.f32 %v395, %v626
        %v628 = vpop.f32.mrb[0].mxu0
        %629 = vmatprep.mubr.bf16.mxu0 0
        %630 = vmatmul.mubr.bf16.gmra.mrb[0].mxu0 %v468
        %v631 = vpop.f32.mrb[0].mxu0
        %v632 = vadd.f32 %v395, %v631
        %v633 = vpop.f32.mrb[0].mxu0
        %v634 = vpop.f32.mrb[0].mxu0
        %v635 = vadd.f32 %v395, %v634
        %v636 = vpop.f32.mrb[0].mxu0
        %637 = vmatprep.mubr.bf16.mxu0 0
        %638 = vmatmul.mubr.bf16.gmra.mrb[0].mxu0 %v469
        %v639 = vpop.f32.mrb[0].mxu0
        %v640 = vadd.f32 %v395, %v639
        %v641 = vpop.f32.mrb[0].mxu0
        %v642 = vpop.f32.mrb[0].mxu0
        %v643 = vadd.f32 %v395, %v642
        %v644 = vpop.f32.mrb[0].mxu0
        %645 = vmatprep.mubr.bf16.mxu0 0
        %646 = vmatmul.mubr.bf16.gmra.mrb[0].mxu0 %v470
        %v647 = vpop.f32.mrb[0].mxu0
        %v648 = vadd.f32 %v395, %v647
        %v649 = vpop.f32.mrb[0].mxu0
        %v650 = vpop.f32.mrb[0].mxu0
        %v651 = vadd.f32 %v395, %v650
        %v652 = vpop.f32.mrb[0].mxu0
        %653 = vmatprep.mubr.bf16.mxu0 0
        %654 = vmatmul.mubr.bf16.gmra.mrb[0].mxu0 %v471
        %v655 = vpop.f32.mrb[0].mxu0
        %v656 = vadd.f32 %v395, %v655
        %v657 = vpop.f32.mrb[0].mxu0
        %v658 = vpop.f32.mrb[0].mxu0
        %v659 = vadd.f32 %v395, %v658
        %v660 = vpop.f32.mrb[0].mxu0
        %661 = vmatprep.mubr.bf16.mxu0 0
        %662 = vmatmul.mubr.bf16.gmra.mrb[0].mxu0 %v472
        %v663 = vpop.f32.mrb[0].mxu0
        %v664 = vadd.f32 %v395, %v663
        %v665 = vpop.f32.mrb[0].mxu0
        %v666 = vpop.f32.mrb[0].mxu0
        %v667 = vadd.f32 %v395, %v666
        %v668 = vpop.f32.mrb[0].mxu0
        %669 = vmatprep.mubr.bf16.mxu0 0
        %670 = vmatmul.mubr.bf16.gmra.mrb[0].mxu0 %v473
        %v671 = vpop.f32.mrb[0].mxu0
        %v672 = vadd.f32 %v395, %v671
        %v673 = vpop.f32.mrb[0].mxu0
        %v674 = vpop.f32.mrb[0].mxu0
        %v675 = vadd.f32 %v395, %v674
        %v676 = vpop.f32.mrb[0].mxu0
        %677 = vmatprep.mubr.bf16.mxu0 0
        %678 = vmatmul.mubr.bf16.gmra.mrb[0].mxu0 %v474
        %v679 = vpop.f32.mrb[0].mxu0
        %v680 = vadd.f32 %v395, %v679
        %v681 = vpop.f32.mrb[0].mxu0
        %v682 = vpop.f32.mrb[0].mxu0
        %v683 = vadd.f32 %v395, %v682
        %v684 = vpop.f32.mrb[0].mxu0
        %685 = vmatprep.mubr.bf16.mxu0 0
        %686 = vmatmul.mubr.bf16.gmra.mrb[0].mxu0 %v475
        %v687 = vpop.f32.mrb[0].mxu0
        %v688 = vadd.f32 %v395, %v687
        %v689 = vpop.f32.mrb[0].mxu0
        %v690 = vpop.f32.mrb[0].mxu0
        %v691 = vadd.f32 %v395, %v690
        %v692 = vpop.f32.mrb[0].mxu0
        %693 = vmatprep.mubr.bf16.mxu0 0
        %694 = vmatmul.mubr.bf16.gmra.mrb[0].mxu0 %v476
        %v695 = vpop.f32.mrb[0].mxu0
        %v696 = vadd.f32 %v395, %v695
        %v697 = vpop.f32.mrb[0].mxu0
        %v698 = vpop.f32.mrb[0].mxu0
        %v699 = vadd.f32 %v395, %v698
        %v700 = vpop.f32.mrb[0].mxu0
        %701 = vdwg.mxu0
        %v702 = vmax.f32 %v576, 0.0
        %v703 = vmax.f32 %v579, 0.0
        %v704 = vmax.f32 %v584, 0.0
        %v705 = vmax.f32 %v587, 0.0
        %v706 = vmax.f32 %v592, 0.0
        %v707 = vmax.f32 %v595, 0.0
        %v708 = vmax.f32 %v600, 0.0
        %v709 = vmax.f32 %v603, 0.0
        %v710 = vmax.f32 %v608, 0.0
        %v711 = vmax.f32 %v611, 0.0
        %v712 = vmax.f32 %v616, 0.0
        %v713 = vmax.f32 %v619, 0.0
        %v714 = vmax.f32 %v624, 0.0
        %v715 = vmax.f32 %v627, 0.0
        %v716 = vmax.f32 %v632, 0.0
        %v717 = vmax.f32 %v635, 0.0
        %v718 = vmax.f32 %v640, 0.0
        %v719 = vmax.f32 %v643, 0.0
        %v720 = vmax.f32 %v648, 0.0
        %v721 = vmax.f32 %v651, 0.0
        %v722 = vmax.f32 %v656, 0.0
        %v723 = vmax.f32 %v659, 0.0
        %v724 = vmax.f32 %v664, 0.0
        %v725 = vmax.f32 %v667, 0.0
        %v726 = vmax.f32 %v672, 0.0
        %v727 = vmax.f32 %v675, 0.0
        %v728 = vmax.f32 %v680, 0.0
        %v729 = vmax.f32 %v683, 0.0
        %v730 = vmax.f32 %v688, 0.0
        %v731 = vmax.f32 %v691, 0.0
        %v732 = vmax.f32 %v696, 0.0
        %v733 = vmax.f32 %v699, 0.0
        %v734 = vpack.c.bf16 %v703, %v702
        %v735 = vpack.c.bf16 %v705, %v704
        %v736 = vpack.c.bf16 %v707, %v706
        %v737 = vpack.c.bf16 %v709, %v708
        %v738 = vpack.c.bf16 %v711, %v710
        %v739 = vpack.c.bf16 %v713, %v712
        %v740 = vpack.c.bf16 %v715, %v714
        %v741 = vpack.c.bf16 %v717, %v716
        %v742 = vpack.c.bf16 %v719, %v718
        %v743 = vpack.c.bf16 %v721, %v720
        %v744 = vpack.c.bf16 %v723, %v722
        %v745 = vpack.c.bf16 %v725, %v724
        %v746 = vpack.c.bf16 %v727, %v726
        %v747 = vpack.c.bf16 %v729, %v728
        %v748 = vpack.c.bf16 %v731, %v730
        %v749 = vpack.c.bf16 %v733, %v732
        %v751 = vshrl.u32 %v734, 16
        %v753 = vrot.slane %v751, 7
        %v754 = vshll.u32 %v734, 16
        %v756 = vor.u32 %v753, %v754
        %v758 = vshrl.u32 %v735, 16
        %v760 = vrot.slane %v758, 7
        %v761 = vshll.u32 %v735, 16
        %v763 = vor.u32 %v760, %v761
        %v765 = vshrl.u32 %v736, 16
        %v767 = vrot.slane %v765, 7
        %v768 = vshll.u32 %v736, 16
        %v770 = vor.u32 %v767, %v768
        %v772 = vshrl.u32 %v737, 16
        %v774 = vrot.slane %v772, 7
        %v775 = vshll.u32 %v737, 16
        %v777 = vor.u32 %v774, %v775
        %v779 = vshrl.u32 %v738, 16
        %v781 = vrot.slane %v779, 7
        %v782 = vshll.u32 %v738, 16
        %v784 = vor.u32 %v781, %v782
        %v786 = vshrl.u32 %v739, 16
        %v788 = vrot.slane %v786, 7
        %v789 = vshll.u32 %v739, 16
        %v791 = vor.u32 %v788, %v789
        %v793 = vshrl.u32 %v740, 16
        %v795 = vrot.slane %v793, 7
        %v796 = vshll.u32 %v740, 16
        %v798 = vor.u32 %v795, %v796
        %v800 = vshrl.u32 %v741, 16
        %v802 = vrot.slane %v800, 7
        %v803 = vshll.u32 %v741, 16
        %v805 = vor.u32 %v802, %v803
        %v807 = vshrl.u32 %v742, 16
        %v809 = vrot.slane %v807, 7
        %v810 = vshll.u32 %v742, 16
        %v812 = vor.u32 %v809, %v810
        %v814 = vshrl.u32 %v743, 16
        %v816 = vrot.slane %v814, 7
        %v817 = vshll.u32 %v743, 16
        %v819 = vor.u32 %v816, %v817
        %v821 = vshrl.u32 %v744, 16
        %v823 = vrot.slane %v821, 7
        %v824 = vshll.u32 %v744, 16
        %v826 = vor.u32 %v823, %v824
        %v828 = vshrl.u32 %v745, 16
        %v830 = vrot.slane %v828, 7
        %v831 = vshll.u32 %v745, 16
        %v833 = vor.u32 %v830, %v831
        %v835 = vshrl.u32 %v746, 16
        %v837 = vrot.slane %v835, 7
        %v838 = vshll.u32 %v746, 16
        %v840 = vor.u32 %v837, %v838
        %v842 = vshrl.u32 %v747, 16
        %v844 = vrot.slane %v842, 7
        %v845 = vshll.u32 %v747, 16
        %v847 = vor.u32 %v844, %v845
        %v849 = vshrl.u32 %v748, 16
        %v851 = vrot.slane %v849, 7
        %v852 = vshll.u32 %v748, 16
        %v854 = vor.u32 %v851, %v852
        %v856 = vshrl.u32 %v749, 16
        %v858 = vrot.slane %v856, 7
        %v859 = vshll.u32 %v749, 16
        %v861 = vor.u32 %v858, %v859
        %vm878 = vcmask 1040384
        %vm879 = vsmask.f32 256
        %vm880 = vmand %vm878, %vm879
        %v881 = vsel %vm880, 0, %v756
        %v882 = vsel %vm880, 0, %v763
        %v883 = vsel %vm880, 0, %v770
        %v884 = vsel %vm880, 0, %v777
        %v885 = vsel %vm880, 0, %v784
        %v886 = vsel %vm880, 0, %v791
        %v887 = vsel %vm880, 0, %v798
        %v888 = vsel %vm880, 0, %v805
        %v889 = vsel %vm880, 0, %v812
        %v890 = vsel %vm880, 0, %v819
        %v891 = vsel %vm880, 0, %v826
        %v892 = vsel %vm880, 0, %v833
        %v893 = vsel %vm880, 0, %v840
        %v894 = vsel %vm880, 0, %v847
        %v895 = vsel %vm880, 0, %v854
        %v896 = vsel %vm880, 0, %v861
        %v897 = vrot.slane %v754, 1
        %v898 = vor.u32 %v751, %v897
        %v899 = vrot.slane %v761, 1
        %v900 = vor.u32 %v758, %v899
        %v901 = vrot.slane %v768, 1
        %v902 = vor.u32 %v765, %v901
        %v903 = vrot.slane %v775, 1
        %v904 = vor.u32 %v772, %v903
        %v905 = vrot.slane %v782, 1
        %v906 = vor.u32 %v779, %v905
        %v907 = vrot.slane %v789, 1
        %v908 = vor.u32 %v786, %v907
        %v909 = vrot.slane %v796, 1
        %v910 = vor.u32 %v793, %v909
        %v911 = vrot.slane %v803, 1
        %v912 = vor.u32 %v800, %v911
        %v913 = vrot.slane %v810, 1
        %v914 = vor.u32 %v807, %v913
        %v915 = vrot.slane %v817, 1
        %v916 = vor.u32 %v814, %v915
        %v917 = vrot.slane %v824, 1
        %v918 = vor.u32 %v821, %v917
        %v919 = vrot.slane %v831, 1
        %v920 = vor.u32 %v828, %v919
        %v921 = vrot.slane %v838, 1
        %v922 = vor.u32 %v835, %v921
        %v923 = vrot.slane %v845, 1
        %v924 = vor.u32 %v842, %v923
        %v925 = vrot.slane %v852, 1
        %v926 = vor.u32 %v849, %v925
        %v927 = vrot.slane %v859, 1
        %v928 = vor.u32 %v856, %v927
        %vm945 = vcmask 1047552
        %vm946 = vsmask.f32 7424
        %vm947 = vmand %vm945, %vm946
        %v948 = vsel %vm947, %v898, 0
        %v949 = vsel %vm947, %v900, 0
        %v950 = vsel %vm947, %v902, 0
        %v951 = vsel %vm947, %v904, 0
        %v952 = vsel %vm947, %v906, 0
        %v953 = vsel %vm947, %v908, 0
        %v954 = vsel %vm947, %v910, 0
        %v955 = vsel %vm947, %v912, 0
        %v956 = vsel %vm947, %v914, 0
        %v957 = vsel %vm947, %v916, 0
        %v958 = vsel %vm947, %v918, 0
        %v959 = vsel %vm947, %v920, 0
        %v960 = vsel %vm947, %v922, 0
        %v961 = vsel %vm947, %v924, 0
        %v962 = vsel %vm947, %v926, 0
        %v963 = vsel %vm947, %v928, 0
        %964 = vst [vmem:[#allocation2] sm:$0xff] 0
        %965 = vst [vmem:[#allocation2 + $0x8] sm:$0xff] 0
        %966 = vst [vmem:[#allocation2 + $0x10] sm:$0xff] 0
        %s967 = scalar_lea.vmem [#allocation2], 408
        %968 = vst [vmem:[%s967] sm:$0xff] 0
        %969 = vst [vmem:[%s967 + $0x8] sm:$0xff] 0
        %970 = vst [vmem:[%s967 + $0x10] sm:$0xff] 0
        %s971 = scalar_lea.vmem [#allocation2], 24
        %972 = vst [vmem:[%s971] sm:$0xff] %v881
        %973 = vst [vmem:[%s971 + $0x8] sm:$0xff] %v734
        %974 = vst [vmem:[%s971 + $0x10] sm:$0xff] %v948
        %975 = vst [vmem:[%s971 + $0x18] sm:$0xff] %v882
        %976 = vst [vmem:[%s971 + $0x20] sm:$0xff] %v735
        %977 = vst [vmem:[%s971 + $0x28] sm:$0xff] %v949
        %978 = vst [vmem:[%s971 + $0x30] sm:$0xff] %v883
        %979 = vst [vmem:[%s971 + $0x38] sm:$0xff] %v736
        %980 = vst [vmem:[%s971 + $0x40] sm:$0xff] %v950
        %981 = vst [vmem:[%s971 + $0x48] sm:$0xff] %v884
        %982 = vst [vmem:[%s971 + $0x50] sm:$0xff] %v737
        %983 = vst [vmem:[%s971 + $0x58] sm:$0xff] %v951
        %984 = vst [vmem:[%s971 + $0x60] sm:$0xff] %v885
        %985 = vst [vmem:[%s971 + $0x68] sm:$0xff] %v738
        %986 = vst [vmem:[%s971 + $0x70] sm:$0xff] %v952
        %987 = vst [vmem:[%s971 + $0x78] sm:$0xff] %v886
        %988 = vst [vmem:[%s971 + $0x80] sm:$0xff] %v739
        %989 = vst [vmem:[%s971 + $0x88] sm:$0xff] %v953
        %990 = vst [vmem:[%s971 + $0x90] sm:$0xff] %v887
        %991 = vst [vmem:[%s971 + $0x98] sm:$0xff] %v740
        %992 = vst [vmem:[%s971 + $0xa0] sm:$0xff] %v954
        %993 = vst [vmem:[%s971 + $0xa8] sm:$0xff] %v888
        %994 = vst [vmem:[%s971 + $0xb0] sm:$0xff] %v741
        %995 = vst [vmem:[%s971 + $0xb8] sm:$0xff] %v955
        %996 = vst [vmem:[%s971 + $0xc0] sm:$0xff] %v889
        %997 = vst [vmem:[%s971 + $0xc8] sm:$0xff] %v742
        %998 = vst [vmem:[%s971 + $0xd0] sm:$0xff] %v956
        %999 = vst [vmem:[%s971 + $0xd8] sm:$0xff] %v890
        %1000 = vst [vmem:[%s971 + $0xe0] sm:$0xff] %v743
        %1001 = vst [vmem:[%s971 + $0xe8] sm:$0xff] %v957
        %1002 = vst [vmem:[%s971 + $0xf0] sm:$0xff] %v891
        %1003 = vst [vmem:[%s971 + $0xf8] sm:$0xff] %v744
        %1004 = vst [vmem:[%s971 + $0x100] sm:$0xff] %v958
        %1005 = vst [vmem:[%s971 + $0x108] sm:$0xff] %v892
        %1006 = vst [vmem:[%s971 + $0x110] sm:$0xff] %v745
        %1007 = vst [vmem:[%s971 + $0x118] sm:$0xff] %v959
        %1008 = vst [vmem:[%s971 + $0x120] sm:$0xff] %v893
        %1009 = vst [vmem:[%s971 + $0x128] sm:$0xff] %v746
        %1010 = vst [vmem:[%s971 + $0x130] sm:$0xff] %v960
        %1011 = vst [vmem:[%s971 + $0x138] sm:$0xff] %v894
        %1012 = vst [vmem:[%s971 + $0x140] sm:$0xff] %v747
        %1013 = vst [vmem:[%s971 + $0x148] sm:$0xff] %v961
        %1014 = vst [vmem:[%s971 + $0x150] sm:$0xff] %v895
        %1015 = vst [vmem:[%s971 + $0x158] sm:$0xff] %v748
        %1016 = vst [vmem:[%s971 + $0x160] sm:$0xff] %v962
        %1017 = vst [vmem:[%s971 + $0x168] sm:$0xff] %v896
        %1018 = vst [vmem:[%s971 + $0x170] sm:$0xff] %v749
        %1019 = vst [vmem:[%s971 + $0x178] sm:$0xff] %v963
        loop: start=0, step=1, limit=2
        $region65: #{tpu_custom_call.1} parent=47 // loop_pre_header
          _
        $region66: #{tpu_custom_call.1} parent=47 // loop_header
          %s1021 = sphi 0, %s1025
          %p1022 = scmp.ge.s32.totalorder %s1021, 2
        $region67: #{tpu_custom_call.1} parent=47 // loop_header_branch
          %1024 = sbr.rel (%p1022) target = $region71
        $region68: #{tpu_custom_call.1} parent=47 // loop_body
          %s1026 = smul.u32 %s1021, 8
          %s1027 = smul.u32 %s1026, 3
          %s1028 = smul.addr %s1027, 8
          %s1029 = scalar_lea.vmem [#allocation2], %s1028
          %v1030 = vld [vmem:[%s1029] sm:$0xff]
          %v1031 = vld [vmem:[%s1029 + $0x8] sm:$0xff]
          %v1032 = vld [vmem:[%s1029 + $0x10] sm:$0xff]
          %v1033 = vld [vmem:[%s1029 + $0x18] sm:$0xff]
          %v1034 = vld [vmem:[%s1029 + $0x20] sm:$0xff]
          %v1035 = vld [vmem:[%s1029 + $0x28] sm:$0xff]
          %v1036 = vld [vmem:[%s1029 + $0x30] sm:$0xff]
          %v1037 = vld [vmem:[%s1029 + $0x38] sm:$0xff]
          %v1038 = vld [vmem:[%s1029 + $0x40] sm:$0xff]
          %v1039 = vld [vmem:[%s1029 + $0x48] sm:$0xff]
          %v1040 = vld [vmem:[%s1029 + $0x50] sm:$0xff]
          %v1041 = vld [vmem:[%s1029 + $0x58] sm:$0xff]
          %v1042 = vld [vmem:[%s1029 + $0x60] sm:$0xff]
          %v1043 = vld [vmem:[%s1029 + $0x68] sm:$0xff]
          %v1044 = vld [vmem:[%s1029 + $0x70] sm:$0xff]
          %v1045 = vld [vmem:[%s1029 + $0x78] sm:$0xff]
          %v1046 = vld [vmem:[%s1029 + $0x80] sm:$0xff]
          %v1047 = vld [vmem:[%s1029 + $0x88] sm:$0xff]
          %v1048 = vld [vmem:[%s1029 + $0x90] sm:$0xff]
          %v1049 = vld [vmem:[%s1029 + $0x98] sm:$0xff]
          %v1050 = vld [vmem:[%s1029 + $0xa0] sm:$0xff]
          %v1051 = vld [vmem:[%s1029 + $0xa8] sm:$0xff]
          %v1052 = vld [vmem:[%s1029 + $0xb0] sm:$0xff]
          %v1053 = vld [vmem:[%s1029 + $0xb8] sm:$0xff]
          %v1054 = vld [vmem:[#allocation8] sm:$0xf]
          %v1055 = vld [vmem:[#allocation8 + $0x4] sm:$0xf]
          %v1056 = vld [vmem:[#allocation8 + $0x8] sm:$0xf]
          %v1057 = vld [vmem:[#allocation8 + $0xc] sm:$0xf]
          %v1058 = vld [vmem:[#allocation8 + $0x10] sm:$0xf]
          %v1059 = vld [vmem:[#allocation8 + $0x14] sm:$0xf]
          %v1060 = vld [vmem:[#allocation8 + $0x18] sm:$0xf]
          %v1061 = vld [vmem:[#allocation8 + $0x1c] sm:$0xf]
          %v1062 = vld [vmem:[#allocation8 + $0x20] sm:$0xf]
          %v1063 = vld [vmem:[#allocation8 + $0x24] sm:$0xf]
          %v1064 = vld [vmem:[#allocation8 + $0x28] sm:$0xf]
          %v1065 = vld [vmem:[#allocation8 + $0x2c] sm:$0xf]
          %v1066 = vld [vmem:[#allocation8 + $0x30] sm:$0xf]
          %v1067 = vld [vmem:[#allocation8 + $0x34] sm:$0xf]
          %v1068 = vld [vmem:[#allocation8 + $0x38] sm:$0xf]
          %v1069 = vld [vmem:[#allocation8 + $0x3c] sm:$0xf]
          %v1070 = vld [vmem:[#allocation8 + $0x40] sm:$0xf]
          %v1071 = vld [vmem:[#allocation8 + $0x44] sm:$0xf]
          %v1072 = vld [vmem:[#allocation8 + $0x48] sm:$0xf]
          %v1073 = vld [vmem:[#allocation8 + $0x4c] sm:$0xf]
          %v1074 = vld [vmem:[#allocation8 + $0x50] sm:$0xf]
          %v1075 = vld [vmem:[#allocation8 + $0x54] sm:$0xf]
          %v1076 = vld [vmem:[#allocation8 + $0x58] sm:$0xf]
          %v1077 = vld [vmem:[#allocation8 + $0x5c] sm:$0xf]
          %v1078 = vld [vmem:[#allocation8 + $0x60] sm:$0xf]
          %v1079 = vld [vmem:[#allocation8 + $0x64] sm:$0xf]
          %v1080 = vld [vmem:[#allocation8 + $0x68] sm:$0xf]
          %v1081 = vld [vmem:[#allocation8 + $0x6c] sm:$0xf]
          %v1082 = vld [vmem:[#allocation8 + $0x70] sm:$0xf]
          %v1083 = vld [vmem:[#allocation8 + $0x74] sm:$0xf]
          %v1084 = vld [vmem:[#allocation8 + $0x78] sm:$0xf]
          %v1085 = vld [vmem:[#allocation8 + $0x7c] sm:$0xf]
          %v1086 = vld [vmem:[#allocation8 + $0x80] sm:$0xf]
          %v1087 = vld [vmem:[#allocation8 + $0x84] sm:$0xf]
          %v1088 = vld [vmem:[#allocation8 + $0x88] sm:$0xf]
          %v1089 = vld [vmem:[#allocation8 + $0x8c] sm:$0xf]
          %v1090 = vld [vmem:[#allocation8 + $0x90] sm:$0xf]
          %v1091 = vld [vmem:[#allocation8 + $0x94] sm:$0xf]
          %v1092 = vld [vmem:[#allocation8 + $0x98] sm:$0xf]
          %v1093 = vld [vmem:[#allocation8 + $0x9c] sm:$0xf]
          %v1094 = vld [vmem:[#allocation8 + $0xa0] sm:$0xf]
          %v1095 = vld [vmem:[#allocation8 + $0xa4] sm:$0xf]
          %v1096 = vld [vmem:[#allocation8 + $0xa8] sm:$0xf]
          %v1097 = vld [vmem:[#allocation8 + $0xac] sm:$0xf]
          %v1098 = vld [vmem:[#allocation8 + $0xb0] sm:$0xf]
          %v1099 = vld [vmem:[#allocation8 + $0xb4] sm:$0xf]
          %v1100 = vld [vmem:[#allocation8 + $0xb8] sm:$0xf]
          %v1101 = vld [vmem:[#allocation8 + $0xbc] sm:$0xf]
          %s1102 = sadd.s32 %s1026, 1
          %s1103 = smul.u32 %s1102, 3
          %s1104 = smul.addr %s1103, 8
          %s1105 = scalar_lea.vmem [#allocation2], %s1104
          %v1106 = vld [vmem:[%s1105] sm:$0xff]
          %v1107 = vld [vmem:[%s1105 + $0x8] sm:$0xff]
          %v1108 = vld [vmem:[%s1105 + $0x10] sm:$0xff]
          %v1109 = vld [vmem:[%s1105 + $0x18] sm:$0xff]
          %v1110 = vld [vmem:[%s1105 + $0x20] sm:$0xff]
          %v1111 = vld [vmem:[%s1105 + $0x28] sm:$0xff]
          %v1112 = vld [vmem:[%s1105 + $0x30] sm:$0xff]
          %v1113 = vld [vmem:[%s1105 + $0x38] sm:$0xff]
          %v1114 = vld [vmem:[%s1105 + $0x40] sm:$0xff]
          %v1115 = vld [vmem:[%s1105 + $0x48] sm:$0xff]
          %v1116 = vld [vmem:[%s1105 + $0x50] sm:$0xff]
          %v1117 = vld [vmem:[%s1105 + $0x58] sm:$0xff]
          %v1118 = vld [vmem:[%s1105 + $0x60] sm:$0xff]
          %v1119 = vld [vmem:[%s1105 + $0x68] sm:$0xff]
          %v1120 = vld [vmem:[%s1105 + $0x70] sm:$0xff]
          %v1121 = vld [vmem:[%s1105 + $0x78] sm:$0xff]
          %v1122 = vld [vmem:[%s1105 + $0x80] sm:$0xff]
          %v1123 = vld [vmem:[%s1105 + $0x88] sm:$0xff]
          %v1124 = vld [vmem:[%s1105 + $0x90] sm:$0xff]
          %v1125 = vld [vmem:[%s1105 + $0x98] sm:$0xff]
          %v1126 = vld [vmem:[%s1105 + $0xa0] sm:$0xff]
          %v1127 = vld [vmem:[%s1105 + $0xa8] sm:$0xff]
          %v1128 = vld [vmem:[%s1105 + $0xb0] sm:$0xff]
          %v1129 = vld [vmem:[%s1105 + $0xb8] sm:$0xff]
          %s1130 = scalar_lea.vmem [#allocation8], 192
          %v1131 = vld [vmem:[%s1130] sm:$0xf]
          %v1132 = vld [vmem:[%s1130 + $0x4] sm:$0xf]
          %v1133 = vld [vmem:[%s1130 + $0x8] sm:$0xf]
          %v1134 = vld [vmem:[%s1130 + $0xc] sm:$0xf]
          %v1135 = vld [vmem:[%s1130 + $0x10] sm:$0xf]
          %v1136 = vld [vmem:[%s1130 + $0x14] sm:$0xf]
          %v1137 = vld [vmem:[%s1130 + $0x18] sm:$0xf]
          %v1138 = vld [vmem:[%s1130 + $0x1c] sm:$0xf]
          %v1139 = vld [vmem:[%s1130 + $0x20] sm:$0xf]
          %v1140 = vld [vmem:[%s1130 + $0x24] sm:$0xf]
          %v1141 = vld [vmem:[%s1130 + $0x28] sm:$0xf]
          %v1142 = vld [vmem:[%s1130 + $0x2c] sm:$0xf]
          %v1143 = vld [vmem:[%s1130 + $0x30] sm:$0xf]
          %v1144 = vld [vmem:[%s1130 + $0x34] sm:$0xf]
          %v1145 = vld [vmem:[%s1130 + $0x38] sm:$0xf]
          %v1146 = vld [vmem:[%s1130 + $0x3c] sm:$0xf]
          %v1147 = vld [vmem:[%s1130 + $0x40] sm:$0xf]
          %v1148 = vld [vmem:[%s1130 + $0x44] sm:$0xf]
          %v1149 = vld [vmem:[%s1130 + $0x48] sm:$0xf]
          %v1150 = vld [vmem:[%s1130 + $0x4c] sm:$0xf]
          %v1151 = vld [vmem:[%s1130 + $0x50] sm:$0xf]
          %v1152 = vld [vmem:[%s1130 + $0x54] sm:$0xf]
          %v1153 = vld [vmem:[%s1130 + $0x58] sm:$0xf]
          %v1154 = vld [vmem:[%s1130 + $0x5c] sm:$0xf]
          %v1155 = vld [vmem:[%s1130 + $0x60] sm:$0xf]
          %v1156 = vld [vmem:[%s1130 + $0x64] sm:$0xf]
          %v1157 = vld [vmem:[%s1130 + $0x68] sm:$0xf]
          %v1158 = vld [vmem:[%s1130 + $0x6c] sm:$0xf]
          %v1159 = vld [vmem:[%s1130 + $0x70] sm:$0xf]
          %v1160 = vld [vmem:[%s1130 + $0x74] sm:$0xf]
          %v1161 = vld [vmem:[%s1130 + $0x78] sm:$0xf]
          %v1162 = vld [vmem:[%s1130 + $0x7c] sm:$0xf]
          %v1163 = vld [vmem:[%s1130 + $0x80] sm:$0xf]
          %v1164 = vld [vmem:[%s1130 + $0x84] sm:$0xf]
          %v1165 = vld [vmem:[%s1130 + $0x88] sm:$0xf]
          %v1166 = vld [vmem:[%s1130 + $0x8c] sm:$0xf]
          %v1167 = vld [vmem:[%s1130 + $0x90] sm:$0xf]
          %v1168 = vld [vmem:[%s1130 + $0x94] sm:$0xf]
          %v1169 = vld [vmem:[%s1130 + $0x98] sm:$0xf]
          %v1170 = vld [vmem:[%s1130 + $0x9c] sm:$0xf]
          %v1171 = vld [vmem:[%s1130 + $0xa0] sm:$0xf]
          %v1172 = vld [vmem:[%s1130 + $0xa4] sm:$0xf]
          %v1173 = vld [vmem:[%s1130 + $0xa8] sm:$0xf]
          %v1174 = vld [vmem:[%s1130 + $0xac] sm:$0xf]
          %v1175 = vld [vmem:[%s1130 + $0xb0] sm:$0xf]
          %v1176 = vld [vmem:[%s1130 + $0xb4] sm:$0xf]
          %v1177 = vld [vmem:[%s1130 + $0xb8] sm:$0xf]
          %v1178 = vld [vmem:[%s1130 + $0xbc] sm:$0xf]
          %v1227 = vunpack.c.l.b16 %v1131
          %v1228 = vunpack.c.l.b16 %v1132
          %v1229 = vunpack.c.l.b16 %v1133
          %v1230 = vunpack.c.l.b16 %v1134
          %v1231 = vunpack.c.l.b16 %v1135
          %v1232 = vunpack.c.l.b16 %v1136
          %v1233 = vunpack.c.l.b16 %v1137
          %v1234 = vunpack.c.l.b16 %v1138
          %v1235 = vunpack.c.l.b16 %v1139
          %v1236 = vunpack.c.l.b16 %v1140
          %v1237 = vunpack.c.l.b16 %v1141
          %v1238 = vunpack.c.l.b16 %v1142
          %v1239 = vunpack.c.l.b16 %v1143
          %v1240 = vunpack.c.l.b16 %v1144
          %v1241 = vunpack.c.l.b16 %v1145
          %v1242 = vunpack.c.l.b16 %v1146
          %v1243 = vunpack.c.l.b16 %v1147
          %v1244 = vunpack.c.l.b16 %v1148
          %v1245 = vunpack.c.l.b16 %v1149
          %v1246 = vunpack.c.l.b16 %v1150
          %v1247 = vunpack.c.l.b16 %v1151
          %v1248 = vunpack.c.l.b16 %v1152
          %v1249 = vunpack.c.l.b16 %v1153
          %v1250 = vunpack.c.l.b16 %v1154
          %v1251 = vunpack.c.l.b16 %v1155
          %v1252 = vunpack.c.l.b16 %v1156
          %v1253 = vunpack.c.l.b16 %v1157
          %v1254 = vunpack.c.l.b16 %v1158
          %v1255 = vunpack.c.l.b16 %v1159
          %v1256 = vunpack.c.l.b16 %v1160
          %v1257 = vunpack.c.l.b16 %v1161
          %v1258 = vunpack.c.l.b16 %v1162
          %v1259 = vunpack.c.l.b16 %v1163
          %v1260 = vunpack.c.l.b16 %v1164
          %v1261 = vunpack.c.l.b16 %v1165
          %v1262 = vunpack.c.l.b16 %v1166
          %v1263 = vunpack.c.l.b16 %v1167
          %v1264 = vunpack.c.l.b16 %v1168
          %v1265 = vunpack.c.l.b16 %v1169
          %v1266 = vunpack.c.l.b16 %v1170
          %v1267 = vunpack.c.l.b16 %v1171
          %v1268 = vunpack.c.l.b16 %v1172
          %v1269 = vunpack.c.l.b16 %v1173
          %v1270 = vunpack.c.l.b16 %v1174
          %v1271 = vunpack.c.l.b16 %v1175
          %v1272 = vunpack.c.l.b16 %v1176
          %v1273 = vunpack.c.l.b16 %v1177
          %v1274 = vunpack.c.l.b16 %v1178
          %v1275 = vpack.c.b16 %v1228, %v1227
          %v1276 = vpack.c.b16 %v1230, %v1229
          %v1277 = vpack.c.b16 %v1232, %v1231
          %v1278 = vpack.c.b16 %v1234, %v1233
          %v1279 = vpack.c.b16 %v1236, %v1235
          %v1280 = vpack.c.b16 %v1238, %v1237
          %v1281 = vpack.c.b16 %v1240, %v1239
          %v1282 = vpack.c.b16 %v1242, %v1241
          %v1283 = vpack.c.b16 %v1244, %v1243
          %v1284 = vpack.c.b16 %v1246, %v1245
          %v1285 = vpack.c.b16 %v1248, %v1247
          %v1286 = vpack.c.b16 %v1250, %v1249
          %v1287 = vpack.c.b16 %v1252, %v1251
          %v1288 = vpack.c.b16 %v1254, %v1253
          %v1289 = vpack.c.b16 %v1256, %v1255
          %v1290 = vpack.c.b16 %v1258, %v1257
          %v1291 = vpack.c.b16 %v1260, %v1259
          %v1292 = vpack.c.b16 %v1262, %v1261
          %v1293 = vpack.c.b16 %v1264, %v1263
          %v1294 = vpack.c.b16 %v1266, %v1265
          %v1295 = vpack.c.b16 %v1268, %v1267
          %v1296 = vpack.c.b16 %v1270, %v1269
          %v1297 = vpack.c.b16 %v1272, %v1271
          %v1298 = vpack.c.b16 %v1274, %v1273
          %1323 = vmatprep.subr.bf16.mxu0 0
          %1324 = vmatpush1.bf16.msra.mxu0 %v1275
          %1325 = vmatprep.subr.bf16.mxu0 0
          %1326 = vmatpush1.bf16.msra.mxu0 %v1276
          %1327 = vmatprep.subr.bf16.mxu0 0
          %1328 = vmatpush1.bf16.msra.mxu0 %v1277
          %1329 = vmatprep.subr.bf16.mxu0 0
          %1330 = vmatpush1.bf16.msra.mxu0 %v1278
          %1331 = vmatprep.subr.bf16.mxu0 0
          %1332 = vmatpush1.bf16.msra.mxu0 %v1279
          %1333 = vmatprep.subr.bf16.mxu0 0
          %1334 = vmatpush1.bf16.msra.mxu0 %v1280
          %1335 = vmatprep.subr.bf16.mxu0 0
          %1336 = vmatpush1.bf16.msra.mxu0 %v1281
          %1337 = vmatprep.subr.bf16.mxu0 0
          %1338 = vmatpush1.bf16.msra.mxu0 %v1282
          %1339 = vmatprep.subr.bf16.mxu0 0
          %1340 = vmatpush1.bf16.msra.mxu0 %v1283
          %1341 = vmatprep.subr.bf16.mxu0 0
          %1342 = vmatpush1.bf16.msra.mxu0 %v1284
          %1343 = vmatprep.subr.bf16.mxu0 0
          %1344 = vmatpush1.bf16.msra.mxu0 %v1285
          %1345 = vmatprep.subr.bf16.mxu0 0
          %1346 = vmatpush1.bf16.msra.mxu0 %v1286
          %1347 = vmatprep.subr.bf16.mxu0 0
          %1348 = vmatpush1.bf16.msra.mxu0 %v1287
          %1349 = vmatprep.subr.bf16.mxu0 0
          %1350 = vmatpush1.bf16.msra.mxu0 %v1288
          %1351 = vmatprep.subr.bf16.mxu0 0
          %1352 = vmatpush1.bf16.msra.mxu0 %v1289
          %1353 = vmatprep.subr.bf16.mxu0 0
          %1354 = vmatpush1.bf16.msra.mxu0 %v1290
          %1355 = vmatprep.mubr.bf16.mxu0 %v1107
          %1356 = vmatmul.mubr.bf16.gmra.mrb[0].mxu0 %v1106
          %v1357 = vpop.f32.mrb[0].mxu0
          %v1358 = vadd.f32 0.0, %v1357
          %v1359 = vpop.f32.mrb[0].mxu0
          %v1360 = vpop.f32.mrb[0].mxu0
          %v1361 = vadd.f32 0.0, %v1360
          %v1362 = vpop.f32.mrb[0].mxu0
          %1363 = vmatprep.mubr.bf16.mxu0 %v1110
          %1364 = vmatmul.mubr.bf16.gmra.mrb[0].mxu0 %v1109
          %v1365 = vpop.f32.mrb[0].mxu0
          %v1366 = vadd.f32 0.0, %v1365
          %v1367 = vpop.f32.mrb[0].mxu0
          %v1368 = vpop.f32.mrb[0].mxu0
          %v1369 = vadd.f32 0.0, %v1368
          %v1370 = vpop.f32.mrb[0].mxu0
          %1371 = vmatprep.mubr.bf16.mxu0 %v1113
          %1372 = vmatmul.mubr.bf16.gmra.mrb[0].mxu0 %v1112
          %v1373 = vpop.f32.mrb[0].mxu0
          %v1374 = vadd.f32 0.0, %v1373
          %v1375 = vpop.f32.mrb[0].mxu0
          %v1376 = vpop.f32.mrb[0].mxu0
          %v1377 = vadd.f32 0.0, %v1376
          %v1378 = vpop.f32.mrb[0].mxu0
          %1379 = vmatprep.mubr.bf16.mxu0 %v1116
          %1380 = vmatmul.mubr.bf16.gmra.mrb[0].mxu0 %v1115
          %v1381 = vpop.f32.mrb[0].mxu0
          %v1382 = vadd.f32 0.0, %v1381
          %v1383 = vpop.f32.mrb[0].mxu0
          %v1384 = vpop.f32.mrb[0].mxu0
          %v1385 = vadd.f32 0.0, %v1384
          %v1386 = vpop.f32.mrb[0].mxu0
          %1387 = vmatprep.mubr.bf16.mxu0 %v1119
          %1388 = vmatmul.mubr.bf16.gmra.mrb[0].mxu0 %v1118
          %v1389 = vpop.f32.mrb[0].mxu0
          %v1390 = vadd.f32 0.0, %v1389
          %v1391 = vpop.f32.mrb[0].mxu0
          %v1392 = vpop.f32.mrb[0].mxu0
          %v1393 = vadd.f32 0.0, %v1392
          %v1394 = vpop.f32.mrb[0].mxu0
          %1395 = vmatprep.mubr.bf16.mxu0 %v1122
          %1396 = vmatmul.mubr.bf16.gmra.mrb[0].mxu0 %v1121
          %v1397 = vpop.f32.mrb[0].mxu0
          %v1398 = vadd.f32 0.0, %v1397
          %v1399 = vpop.f32.mrb[0].mxu0
          %v1400 = vpop.f32.mrb[0].mxu0
          %v1401 = vadd.f32 0.0, %v1400
          %v1402 = vpop.f32.mrb[0].mxu0
          %1403 = vmatprep.mubr.bf16.mxu0 %v1125
          %1404 = vmatmul.mubr.bf16.gmra.mrb[0].mxu0 %v1124
          %v1405 = vpop.f32.mrb[0].mxu0
          %v1406 = vadd.f32 0.0, %v1405
          %v1407 = vpop.f32.mrb[0].mxu0
          %v1408 = vpop.f32.mrb[0].mxu0
          %v1409 = vadd.f32 0.0, %v1408
          %v1410 = vpop.f32.mrb[0].mxu0
          %1411 = vmatprep.mubr.bf16.mxu0 %v1128
          %1412 = vmatmul.mubr.bf16.gmra.mrb[0].mxu0 %v1127
          %v1413 = vpop.f32.mrb[0].mxu0
          %v1414 = vadd.f32 0.0, %v1413
          %v1415 = vpop.f32.mrb[0].mxu0
          %v1416 = vpop.f32.mrb[0].mxu0
          %v1417 = vadd.f32 0.0, %v1416
          %v1418 = vpop.f32.mrb[0].mxu0
          %1419 = vdwg.mxu0
          %1420 = vmatprep.subr.bf16.mxu0 0
          %1421 = vmatpush1.bf16.msra.mxu0 %v1291
          %1422 = vmatprep.subr.bf16.mxu0 0
          %1423 = vmatpush1.bf16.msra.mxu0 %v1292
          %1424 = vmatprep.subr.bf16.mxu0 0
          %1425 = vmatpush1.bf16.msra.mxu0 %v1293
          %1426 = vmatprep.subr.bf16.mxu0 0
          %1427 = vmatpush1.bf16.msra.mxu0 %v1294
          %1428 = vmatprep.subr.bf16.mxu0 0
          %1429 = vmatpush1.bf16.msra.mxu0 %v1295
          %1430 = vmatprep.subr.bf16.mxu0 0
          %1431 = vmatpush1.bf16.msra.mxu0 %v1296
          %1432 = vmatprep.subr.bf16.mxu0 0
          %1433 = vmatpush1.bf16.msra.mxu0 %v1297
          %1434 = vmatprep.subr.bf16.mxu0 0
          %1435 = vmatpush1.bf16.msra.mxu0 %v1298
          %1436 = vmatprep.subr.bf16.mxu0 0
          %1437 = vmatpush1.bf16.msra.mxu0 0
          %1438 = vmatprep.subr.bf16.mxu0 0
          %1439 = vmatpush1.bf16.msra.mxu0 0
          %1440 = vmatprep.subr.bf16.mxu0 0
          %1441 = vmatpush1.bf16.msra.mxu0 0
          %1442 = vmatprep.subr.bf16.mxu0 0
          %1443 = vmatpush1.bf16.msra.mxu0 0
          %1444 = vmatprep.subr.bf16.mxu0 0
          %1445 = vmatpush1.bf16.msra.mxu0 0
          %1446 = vmatprep.subr.bf16.mxu0 0
          %1447 = vmatpush1.bf16.msra.mxu0 0
          %1448 = vmatprep.subr.bf16.mxu0 0
          %1449 = vmatpush1.bf16.msra.mxu0 0
          %1450 = vmatprep.subr.bf16.mxu0 0
          %1451 = vmatpush1.bf16.msra.mxu0 0
          %1452 = vmatprep.mubr.bf16.mxu0 0
          %1453 = vmatmul.mubr.bf16.gmra.mrb[0].mxu0 %v1108
          %v1454 = vpop.f32.mrb[0].mxu0
          %v1455 = vadd.f32 %v1358, %v1454
          %v1456 = vpop.f32.mrb[0].mxu0
          %v1457 = vpop.f32.mrb[0].mxu0
          %v1458 = vadd.f32 %v1361, %v1457
          %v1459 = vpop.f32.mrb[0].mxu0
          %1460 = vmatprep.mubr.bf16.mxu0 0
          %1461 = vmatmul.mubr.bf16.gmra.mrb[0].mxu0 %v1111
          %v1462 = vpop.f32.mrb[0].mxu0
          %v1463 = vadd.f32 %v1366, %v1462
          %v1464 = vpop.f32.mrb[0].mxu0
          %v1465 = vpop.f32.mrb[0].mxu0
          %v1466 = vadd.f32 %v1369, %v1465
          %v1467 = vpop.f32.mrb[0].mxu0
          %1468 = vmatprep.mubr.bf16.mxu0 0
          %1469 = vmatmul.mubr.bf16.gmra.mrb[0].mxu0 %v1114
          %v1470 = vpop.f32.mrb[0].mxu0
          %v1471 = vadd.f32 %v1374, %v1470
          %v1472 = vpop.f32.mrb[0].mxu0
          %v1473 = vpop.f32.mrb[0].mxu0
          %v1474 = vadd.f32 %v1377, %v1473
          %v1475 = vpop.f32.mrb[0].mxu0
          %1476 = vmatprep.mubr.bf16.mxu0 0
          %1477 = vmatmul.mubr.bf16.gmra.mrb[0].mxu0 %v1117
          %v1478 = vpop.f32.mrb[0].mxu0
          %v1479 = vadd.f32 %v1382, %v1478
          %v1480 = vpop.f32.mrb[0].mxu0
          %v1481 = vpop.f32.mrb[0].mxu0
          %v1482 = vadd.f32 %v1385, %v1481
          %v1483 = vpop.f32.mrb[0].mxu0
          %1484 = vmatprep.mubr.bf16.mxu0 0
          %1485 = vmatmul.mubr.bf16.gmra.mrb[0].mxu0 %v1120
          %v1486 = vpop.f32.mrb[0].mxu0
          %v1487 = vadd.f32 %v1390, %v1486
          %v1488 = vpop.f32.mrb[0].mxu0
          %v1489 = vpop.f32.mrb[0].mxu0
          %v1490 = vadd.f32 %v1393, %v1489
          %v1491 = vpop.f32.mrb[0].mxu0
          %1492 = vmatprep.mubr.bf16.mxu0 0
          %1493 = vmatmul.mubr.bf16.gmra.mrb[0].mxu0 %v1123
          %v1494 = vpop.f32.mrb[0].mxu0
          %v1495 = vadd.f32 %v1398, %v1494
          %v1496 = vpop.f32.mrb[0].mxu0
          %v1497 = vpop.f32.mrb[0].mxu0
          %v1498 = vadd.f32 %v1401, %v1497
          %v1499 = vpop.f32.mrb[0].mxu0
          %1500 = vmatprep.mubr.bf16.mxu0 0
          %1501 = vmatmul.mubr.bf16.gmra.mrb[0].mxu0 %v1126
          %v1502 = vpop.f32.mrb[0].mxu0
          %v1503 = vadd.f32 %v1406, %v1502
          %v1504 = vpop.f32.mrb[0].mxu0
          %v1505 = vpop.f32.mrb[0].mxu0
          %v1506 = vadd.f32 %v1409, %v1505
          %v1507 = vpop.f32.mrb[0].mxu0
          %1508 = vmatprep.mubr.bf16.mxu0 0
          %1509 = vmatmul.mubr.bf16.gmra.mrb[0].mxu0 %v1129
          %v1510 = vpop.f32.mrb[0].mxu0
          %v1511 = vadd.f32 %v1414, %v1510
          %v1512 = vpop.f32.mrb[0].mxu0
          %v1513 = vpop.f32.mrb[0].mxu0
          %v1514 = vadd.f32 %v1417, %v1513
          %v1515 = vpop.f32.mrb[0].mxu0
          %1516 = vdwg.mxu0
          %v1565 = vunpack.c.l.b16 %v1054
          %v1566 = vunpack.c.l.b16 %v1055
          %v1567 = vunpack.c.l.b16 %v1056
          %v1568 = vunpack.c.l.b16 %v1057
          %v1569 = vunpack.c.l.b16 %v1058
          %v1570 = vunpack.c.l.b16 %v1059
          %v1571 = vunpack.c.l.b16 %v1060
          %v1572 = vunpack.c.l.b16 %v1061
          %v1573 = vunpack.c.l.b16 %v1062
          %v1574 = vunpack.c.l.b16 %v1063
          %v1575 = vunpack.c.l.b16 %v1064
          %v1576 = vunpack.c.l.b16 %v1065
          %v1577 = vunpack.c.l.b16 %v1066
          %v1578 = vunpack.c.l.b16 %v1067
          %v1579 = vunpack.c.l.b16 %v1068
          %v1580 = vunpack.c.l.b16 %v1069
          %v1581 = vunpack.c.l.b16 %v1070
          %v1582 = vunpack.c.l.b16 %v1071
          %v1583 = vunpack.c.l.b16 %v1072
          %v1584 = vunpack.c.l.b16 %v1073
          %v1585 = vunpack.c.l.b16 %v1074
          %v1586 = vunpack.c.l.b16 %v1075
          %v1587 = vunpack.c.l.b16 %v1076
          %v1588 = vunpack.c.l.b16 %v1077
          %v1589 = vunpack.c.l.b16 %v1078
          %v1590 = vunpack.c.l.b16 %v1079
          %v1591 = vunpack.c.l.b16 %v1080
          %v1592 = vunpack.c.l.b16 %v1081
          %v1593 = vunpack.c.l.b16 %v1082
          %v1594 = vunpack.c.l.b16 %v1083
          %v1595 = vunpack.c.l.b16 %v1084
          %v1596 = vunpack.c.l.b16 %v1085
          %v1597 = vunpack.c.l.b16 %v1086
          %v1598 = vunpack.c.l.b16 %v1087
          %v1599 = vunpack.c.l.b16 %v1088
          %v1600 = vunpack.c.l.b16 %v1089
          %v1601 = vunpack.c.l.b16 %v1090
          %v1602 = vunpack.c.l.b16 %v1091
          %v1603 = vunpack.c.l.b16 %v1092
          %v1604 = vunpack.c.l.b16 %v1093
          %v1605 = vunpack.c.l.b16 %v1094
          %v1606 = vunpack.c.l.b16 %v1095
          %v1607 = vunpack.c.l.b16 %v1096
          %v1608 = vunpack.c.l.b16 %v1097
          %v1609 = vunpack.c.l.b16 %v1098
          %v1610 = vunpack.c.l.b16 %v1099
          %v1611 = vunpack.c.l.b16 %v1100
          %v1612 = vunpack.c.l.b16 %v1101
          %v1613 = vpack.c.b16 %v1566, %v1565
          %v1614 = vpack.c.b16 %v1568, %v1567
          %v1615 = vpack.c.b16 %v1570, %v1569
          %v1616 = vpack.c.b16 %v1572, %v1571
          %v1617 = vpack.c.b16 %v1574, %v1573
          %v1618 = vpack.c.b16 %v1576, %v1575
          %v1619 = vpack.c.b16 %v1578, %v1577
          %v1620 = vpack.c.b16 %v1580, %v1579
          %v1621 = vpack.c.b16 %v1582, %v1581
          %v1622 = vpack.c.b16 %v1584, %v1583
          %v1623 = vpack.c.b16 %v1586, %v1585
          %v1624 = vpack.c.b16 %v1588, %v1587
          %v1625 = vpack.c.b16 %v1590, %v1589
          %v1626 = vpack.c.b16 %v1592, %v1591
          %v1627 = vpack.c.b16 %v1594, %v1593
          %v1628 = vpack.c.b16 %v1596, %v1595
          %v1629 = vpack.c.b16 %v1598, %v1597
          %v1630 = vpack.c.b16 %v1600, %v1599
          %v1631 = vpack.c.b16 %v1602, %v1601
          %v1632 = vpack.c.b16 %v1604, %v1603
          %v1633 = vpack.c.b16 %v1606, %v1605
          %v1634 = vpack.c.b16 %v1608, %v1607
          %v1635 = vpack.c.b16 %v1610, %v1609
          %v1636 = vpack.c.b16 %v1612, %v1611
          %1661 = vmatprep.subr.bf16.mxu0 0
          %1662 = vmatpush1.bf16.msra.mxu0 %v1613
          %1663 = vmatprep.subr.bf16.mxu0 0
          %1664 = vmatpush1.bf16.msra.mxu0 %v1614
          %1665 = vmatprep.subr.bf16.mxu0 0
          %1666 = vmatpush1.bf16.msra.mxu0 %v1615
          %1667 = vmatprep.subr.bf16.mxu0 0
          %1668 = vmatpush1.bf16.msra.mxu0 %v1616
          %1669 = vmatprep.subr.bf16.mxu0 0
          %1670 = vmatpush1.bf16.msra.mxu0 %v1617
          %1671 = vmatprep.subr.bf16.mxu0 0
          %1672 = vmatpush1.bf16.msra.mxu0 %v1618
          %1673 = vmatprep.subr.bf16.mxu0 0
          %1674 = vmatpush1.bf16.msra.mxu0 %v1619
          %1675 = vmatprep.subr.bf16.mxu0 0
          %1676 = vmatpush1.bf16.msra.mxu0 %v1620
          %1677 = vmatprep.subr.bf16.mxu0 0
          %1678 = vmatpush1.bf16.msra.mxu0 %v1621
          %1679 = vmatprep.subr.bf16.mxu0 0
          %1680 = vmatpush1.bf16.msra.mxu0 %v1622
          %1681 = vmatprep.subr.bf16.mxu0 0
          %1682 = vmatpush1.bf16.msra.mxu0 %v1623
          %1683 = vmatprep.subr.bf16.mxu0 0
          %1684 = vmatpush1.bf16.msra.mxu0 %v1624
          %1685 = vmatprep.subr.bf16.mxu0 0
          %1686 = vmatpush1.bf16.msra.mxu0 %v1625
          %1687 = vmatprep.subr.bf16.mxu0 0
          %1688 = vmatpush1.bf16.msra.mxu0 %v1626
          %1689 = vmatprep.subr.bf16.mxu0 0
          %1690 = vmatpush1.bf16.msra.mxu0 %v1627
          %1691 = vmatprep.subr.bf16.mxu0 0
          %1692 = vmatpush1.bf16.msra.mxu0 %v1628
          %1693 = vmatprep.mubr.bf16.mxu0 %v1031
          %1694 = vmatmul.mubr.bf16.gmra.mrb[0].mxu0 %v1030
          %v1695 = vpop.f32.mrb[0].mxu0
          %v1696 = vadd.f32 %v1455, %v1695
          %v1697 = vpop.f32.mrb[0].mxu0
          %v1698 = vpop.f32.mrb[0].mxu0
          %v1699 = vadd.f32 %v1458, %v1698
          %v1700 = vpop.f32.mrb[0].mxu0
          %1701 = vmatprep.mubr.bf16.mxu0 %v1034
          %1702 = vmatmul.mubr.bf16.gmra.mrb[0].mxu0 %v1033
          %v1703 = vpop.f32.mrb[0].mxu0
          %v1704 = vadd.f32 %v1463, %v1703
          %v1705 = vpop.f32.mrb[0].mxu0
          %v1706 = vpop.f32.mrb[0].mxu0
          %v1707 = vadd.f32 %v1466, %v1706
          %v1708 = vpop.f32.mrb[0].mxu0
          %1709 = vmatprep.mubr.bf16.mxu0 %v1037
          %1710 = vmatmul.mubr.bf16.gmra.mrb[0].mxu0 %v1036
          %v1711 = vpop.f32.mrb[0].mxu0
          %v1712 = vadd.f32 %v1471, %v1711
          %v1713 = vpop.f32.mrb[0].mxu0
          %v1714 = vpop.f32.mrb[0].mxu0
          %v1715 = vadd.f32 %v1474, %v1714
          %v1716 = vpop.f32.mrb[0].mxu0
          %1717 = vmatprep.mubr.bf16.mxu0 %v1040
          %1718 = vmatmul.mubr.bf16.gmra.mrb[0].mxu0 %v1039
          %v1719 = vpop.f32.mrb[0].mxu0
          %v1720 = vadd.f32 %v1479, %v1719
          %v1721 = vpop.f32.mrb[0].mxu0
          %v1722 = vpop.f32.mrb[0].mxu0
          %v1723 = vadd.f32 %v1482, %v1722
          %v1724 = vpop.f32.mrb[0].mxu0
          %1725 = vmatprep.mubr.bf16.mxu0 %v1043
          %1726 = vmatmul.mubr.bf16.gmra.mrb[0].mxu0 %v1042
          %v1727 = vpop.f32.mrb[0].mxu0
          %v1728 = vadd.f32 %v1487, %v1727
          %v1729 = vpop.f32.mrb[0].mxu0
          %v1730 = vpop.f32.mrb[0].mxu0
          %v1731 = vadd.f32 %v1490, %v1730
          %v1732 = vpop.f32.mrb[0].mxu0
          %1733 = vmatprep.mubr.bf16.mxu0 %v1046
          %1734 = vmatmul.mubr.bf16.gmra.mrb[0].mxu0 %v1045
          %v1735 = vpop.f32.mrb[0].mxu0
          %v1736 = vadd.f32 %v1495, %v1735
          %v1737 = vpop.f32.mrb[0].mxu0
          %v1738 = vpop.f32.mrb[0].mxu0
          %v1739 = vadd.f32 %v1498, %v1738
          %v1740 = vpop.f32.mrb[0].mxu0
          %1741 = vmatprep.mubr.bf16.mxu0 %v1049
          %1742 = vmatmul.mubr.bf16.gmra.mrb[0].mxu0 %v1048
          %v1743 = vpop.f32.mrb[0].mxu0
          %v1744 = vadd.f32 %v1503, %v1743
          %v1745 = vpop.f32.mrb[0].mxu0
          %v1746 = vpop.f32.mrb[0].mxu0
          %v1747 = vadd.f32 %v1506, %v1746
          %v1748 = vpop.f32.mrb[0].mxu0
          %1749 = vmatprep.mubr.bf16.mxu0 %v1052
          %1750 = vmatmul.mubr.bf16.gmra.mrb[0].mxu0 %v1051
          %v1751 = vpop.f32.mrb[0].mxu0
          %v1752 = vadd.f32 %v1511, %v1751
          %v1753 = vpop.f32.mrb[0].mxu0
          %v1754 = vpop.f32.mrb[0].mxu0
          %v1755 = vadd.f32 %v1514, %v1754
          %v1756 = vpop.f32.mrb[0].mxu0
          %1757 = vdwg.mxu0
          %1758 = vmatprep.subr.bf16.mxu0 0
          %1759 = vmatpush1.bf16.msra.mxu0 %v1629
          %1760 = vmatprep.subr.bf16.mxu0 0
          %1761 = vmatpush1.bf16.msra.mxu0 %v1630
          %1762 = vmatprep.subr.bf16.mxu0 0
          %1763 = vmatpush1.bf16.msra.mxu0 %v1631
          %1764 = vmatprep.subr.bf16.mxu0 0
          %1765 = vmatpush1.bf16.msra.mxu0 %v1632
          %1766 = vmatprep.subr.bf16.mxu0 0
          %1767 = vmatpush1.bf16.msra.mxu0 %v1633
          %1768 = vmatprep.subr.bf16.mxu0 0
          %1769 = vmatpush1.bf16.msra.mxu0 %v1634
          %1770 = vmatprep.subr.bf16.mxu0 0
          %1771 = vmatpush1.bf16.msra.mxu0 %v1635
          %1772 = vmatprep.subr.bf16.mxu0 0
          %1773 = vmatpush1.bf16.msra.mxu0 %v1636
          %1774 = vmatprep.subr.bf16.mxu0 0
          %1775 = vmatpush1.bf16.msra.mxu0 0
          %1776 = vmatprep.subr.bf16.mxu0 0
          %1777 = vmatpush1.bf16.msra.mxu0 0
          %1778 = vmatprep.subr.bf16.mxu0 0
          %1779 = vmatpush1.bf16.msra.mxu0 0
          %1780 = vmatprep.subr.bf16.mxu0 0
          %1781 = vmatpush1.bf16.msra.mxu0 0
          %1782 = vmatprep.subr.bf16.mxu0 0
          %1783 = vmatpush1.bf16.msra.mxu0 0
          %1784 = vmatprep.subr.bf16.mxu0 0
          %1785 = vmatpush1.bf16.msra.mxu0 0
          %1786 = vmatprep.subr.bf16.mxu0 0
          %1787 = vmatpush1.bf16.msra.mxu0 0
          %1788 = vmatprep.subr.bf16.mxu0 0
          %1789 = vmatpush1.bf16.msra.mxu0 0
          %1790 = vmatprep.mubr.bf16.mxu0 0
          %1791 = vmatmul.mubr.bf16.gmra.mrb[0].mxu0 %v1032
          %v1792 = vpop.f32.mrb[0].mxu0
          %v1793 = vadd.f32 %v1696, %v1792
          %v1794 = vpop.f32.mrb[0].mxu0
          %v1795 = vpop.f32.mrb[0].mxu0
          %v1796 = vadd.f32 %v1699, %v1795
          %v1797 = vpop.f32.mrb[0].mxu0
          %1798 = vmatprep.mubr.bf16.mxu0 0
          %1799 = vmatmul.mubr.bf16.gmra.mrb[0].mxu0 %v1035
          %v1800 = vpop.f32.mrb[0].mxu0
          %v1801 = vadd.f32 %v1704, %v1800
          %v1802 = vpop.f32.mrb[0].mxu0
          %v1803 = vpop.f32.mrb[0].mxu0
          %v1804 = vadd.f32 %v1707, %v1803
          %v1805 = vpop.f32.mrb[0].mxu0
          %1806 = vmatprep.mubr.bf16.mxu0 0
          %1807 = vmatmul.mubr.bf16.gmra.mrb[0].mxu0 %v1038
          %v1808 = vpop.f32.mrb[0].mxu0
          %v1809 = vadd.f32 %v1712, %v1808
          %v1810 = vpop.f32.mrb[0].mxu0
          %v1811 = vpop.f32.mrb[0].mxu0
          %v1812 = vadd.f32 %v1715, %v1811
          %v1813 = vpop.f32.mrb[0].mxu0
          %1814 = vmatprep.mubr.bf16.mxu0 0
          %1815 = vmatmul.mubr.bf16.gmra.mrb[0].mxu0 %v1041
          %v1816 = vpop.f32.mrb[0].mxu0
          %v1817 = vadd.f32 %v1720, %v1816
          %v1818 = vpop.f32.mrb[0].mxu0
          %v1819 = vpop.f32.mrb[0].mxu0
          %v1820 = vadd.f32 %v1723, %v1819
          %v1821 = vpop.f32.mrb[0].mxu0
          %1822 = vmatprep.mubr.bf16.mxu0 0
          %1823 = vmatmul.mubr.bf16.gmra.mrb[0].mxu0 %v1044
          %v1824 = vpop.f32.mrb[0].mxu0
          %v1825 = vadd.f32 %v1728, %v1824
          %v1826 = vpop.f32.mrb[0].mxu0
          %v1827 = vpop.f32.mrb[0].mxu0
          %v1828 = vadd.f32 %v1731, %v1827
          %v1829 = vpop.f32.mrb[0].mxu0
          %1830 = vmatprep.mubr.bf16.mxu0 0
          %1831 = vmatmul.mubr.bf16.gmra.mrb[0].mxu0 %v1047
          %v1832 = vpop.f32.mrb[0].mxu0
          %v1833 = vadd.f32 %v1736, %v1832
          %v1834 = vpop.f32.mrb[0].mxu0
          %v1835 = vpop.f32.mrb[0].mxu0
          %v1836 = vadd.f32 %v1739, %v1835
          %v1837 = vpop.f32.mrb[0].mxu0
          %1838 = vmatprep.mubr.bf16.mxu0 0
          %1839 = vmatmul.mubr.bf16.gmra.mrb[0].mxu0 %v1050
          %v1840 = vpop.f32.mrb[0].mxu0
          %v1841 = vadd.f32 %v1744, %v1840
          %v1842 = vpop.f32.mrb[0].mxu0
          %v1843 = vpop.f32.mrb[0].mxu0
          %v1844 = vadd.f32 %v1747, %v1843
          %v1845 = vpop.f32.mrb[0].mxu0
          %1846 = vmatprep.mubr.bf16.mxu0 0
          %1847 = vmatmul.mubr.bf16.gmra.mrb[0].mxu0 %v1053
          %v1848 = vpop.f32.mrb[0].mxu0
          %v1849 = vadd.f32 %v1752, %v1848
          %v1850 = vpop.f32.mrb[0].mxu0
          %v1851 = vpop.f32.mrb[0].mxu0
          %v1852 = vadd.f32 %v1755, %v1851
          %v1853 = vpop.f32.mrb[0].mxu0
          %1854 = vdwg.mxu0
          %s1855 = sadd.s32 %s1026, 2
          %s1856 = smul.u32 %s1855, 3
          %s1857 = smul.addr %s1856, 8
          %s1858 = scalar_lea.vmem [#allocation2], %s1857
          %v1859 = vld [vmem:[%s1858] sm:$0xff]
          %v1860 = vld [vmem:[%s1858 + $0x8] sm:$0xff]
          %v1861 = vld [vmem:[%s1858 + $0x10] sm:$0xff]
          %v1862 = vld [vmem:[%s1858 + $0x18] sm:$0xff]
          %v1863 = vld [vmem:[%s1858 + $0x20] sm:$0xff]
          %v1864 = vld [vmem:[%s1858 + $0x28] sm:$0xff]
          %v1865 = vld [vmem:[%s1858 + $0x30] sm:$0xff]
          %v1866 = vld [vmem:[%s1858 + $0x38] sm:$0xff]
          %v1867 = vld [vmem:[%s1858 + $0x40] sm:$0xff]
          %v1868 = vld [vmem:[%s1858 + $0x48] sm:$0xff]
          %v1869 = vld [vmem:[%s1858 + $0x50] sm:$0xff]
          %v1870 = vld [vmem:[%s1858 + $0x58] sm:$0xff]
          %v1871 = vld [vmem:[%s1858 + $0x60] sm:$0xff]
          %v1872 = vld [vmem:[%s1858 + $0x68] sm:$0xff]
          %v1873 = vld [vmem:[%s1858 + $0x70] sm:$0xff]
          %v1874 = vld [vmem:[%s1858 + $0x78] sm:$0xff]
          %v1875 = vld [vmem:[%s1858 + $0x80] sm:$0xff]
          %v1876 = vld [vmem:[%s1858 + $0x88] sm:$0xff]
          %v1877 = vld [vmem:[%s1858 + $0x90] sm:$0xff]
          %v1878 = vld [vmem:[%s1858 + $0x98] sm:$0xff]
          %v1879 = vld [vmem:[%s1858 + $0xa0] sm:$0xff]
          %v1880 = vld [vmem:[%s1858 + $0xa8] sm:$0xff]
          %v1881 = vld [vmem:[%s1858 + $0xb0] sm:$0xff]
          %v1882 = vld [vmem:[%s1858 + $0xb8] sm:$0xff]
          %s1883 = scalar_lea.vmem [#allocation8], 384
          %v1884 = vld [vmem:[%s1883] sm:$0xf]
          %v1885 = vld [vmem:[%s1883 + $0x4] sm:$0xf]
          %v1886 = vld [vmem:[%s1883 + $0x8] sm:$0xf]
          %v1887 = vld [vmem:[%s1883 + $0xc] sm:$0xf]
          %v1888 = vld [vmem:[%s1883 + $0x10] sm:$0xf]
          %v1889 = vld [vmem:[%s1883 + $0x14] sm:$0xf]
          %v1890 = vld [vmem:[%s1883 + $0x18] sm:$0xf]
          %v1891 = vld [vmem:[%s1883 + $0x1c] sm:$0xf]
          %v1892 = vld [vmem:[%s1883 + $0x20] sm:$0xf]
          %v1893 = vld [vmem:[%s1883 + $0x24] sm:$0xf]
          %v1894 = vld [vmem:[%s1883 + $0x28] sm:$0xf]
          %v1895 = vld [vmem:[%s1883 + $0x2c] sm:$0xf]
          %v1896 = vld [vmem:[%s1883 + $0x30] sm:$0xf]
          %v1897 = vld [vmem:[%s1883 + $0x34] sm:$0xf]
          %v1898 = vld [vmem:[%s1883 + $0x38] sm:$0xf]
          %v1899 = vld [vmem:[%s1883 + $0x3c] sm:$0xf]
          %v1900 = vld [vmem:[%s1883 + $0x40] sm:$0xf]
          %v1901 = vld [vmem:[%s1883 + $0x44] sm:$0xf]
          %v1902 = vld [vmem:[%s1883 + $0x48] sm:$0xf]
          %v1903 = vld [vmem:[%s1883 + $0x4c] sm:$0xf]
          %v1904 = vld [vmem:[%s1883 + $0x50] sm:$0xf]
          %v1905 = vld [vmem:[%s1883 + $0x54] sm:$0xf]
          %v1906 = vld [vmem:[%s1883 + $0x58] sm:$0xf]
          %v1907 = vld [vmem:[%s1883 + $0x5c] sm:$0xf]
          %v1908 = vld [vmem:[%s1883 + $0x60] sm:$0xf]
          %v1909 = vld [vmem:[%s1883 + $0x64] sm:$0xf]
          %v1910 = vld [vmem:[%s1883 + $0x68] sm:$0xf]
          %v1911 = vld [vmem:[%s1883 + $0x6c] sm:$0xf]
          %v1912 = vld [vmem:[%s1883 + $0x70] sm:$0xf]
          %v1913 = vld [vmem:[%s1883 + $0x74] sm:$0xf]
          %v1914 = vld [vmem:[%s1883 + $0x78] sm:$0xf]
          %v1915 = vld [vmem:[%s1883 + $0x7c] sm:$0xf]
          %v1916 = vld [vmem:[%s1883 + $0x80] sm:$0xf]
          %v1917 = vld [vmem:[%s1883 + $0x84] sm:$0xf]
          %v1918 = vld [vmem:[%s1883 + $0x88] sm:$0xf]
          %v1919 = vld [vmem:[%s1883 + $0x8c] sm:$0xf]
          %v1920 = vld [vmem:[%s1883 + $0x90] sm:$0xf]
          %v1921 = vld [vmem:[%s1883 + $0x94] sm:$0xf]
          %v1922 = vld [vmem:[%s1883 + $0x98] sm:$0xf]
          %v1923 = vld [vmem:[%s1883 + $0x9c] sm:$0xf]
          %v1924 = vld [vmem:[%s1883 + $0xa0] sm:$0xf]
          %v1925 = vld [vmem:[%s1883 + $0xa4] sm:$0xf]
          %v1926 = vld [vmem:[%s1883 + $0xa8] sm:$0xf]
          %v1927 = vld [vmem:[%s1883 + $0xac] sm:$0xf]
          %v1928 = vld [vmem:[%s1883 + $0xb0] sm:$0xf]
          %v1929 = vld [vmem:[%s1883 + $0xb4] sm:$0xf]
          %v1930 = vld [vmem:[%s1883 + $0xb8] sm:$0xf]
          %v1931 = vld [vmem:[%s1883 + $0xbc] sm:$0xf]
          %v1980 = vunpack.c.l.b16 %v1884
          %v1981 = vunpack.c.l.b16 %v1885
          %v1982 = vunpack.c.l.b16 %v1886
          %v1983 = vunpack.c.l.b16 %v1887
          %v1984 = vunpack.c.l.b16 %v1888
          %v1985 = vunpack.c.l.b16 %v1889
          %v1986 = vunpack.c.l.b16 %v1890
          %v1987 = vunpack.c.l.b16 %v1891
          %v1988 = vunpack.c.l.b16 %v1892
          %v1989 = vunpack.c.l.b16 %v1893
          %v1990 = vunpack.c.l.b16 %v1894
          %v1991 = vunpack.c.l.b16 %v1895
          %v1992 = vunpack.c.l.b16 %v1896
          %v1993 = vunpack.c.l.b16 %v1897
          %v1994 = vunpack.c.l.b16 %v1898
          %v1995 = vunpack.c.l.b16 %v1899
          %v1996 = vunpack.c.l.b16 %v1900
          %v1997 = vunpack.c.l.b16 %v1901
          %v1998 = vunpack.c.l.b16 %v1902
          %v1999 = vunpack.c.l.b16 %v1903
          %v2000 = vunpack.c.l.b16 %v1904
          %v2001 = vunpack.c.l.b16 %v1905
          %v2002 = vunpack.c.l.b16 %v1906
          %v2003 = vunpack.c.l.b16 %v1907
          %v2004 = vunpack.c.l.b16 %v1908
          %v2005 = vunpack.c.l.b16 %v1909
          %v2006 = vunpack.c.l.b16 %v1910
          %v2007 = vunpack.c.l.b16 %v1911
          %v2008 = vunpack.c.l.b16 %v1912
          %v2009 = vunpack.c.l.b16 %v1913
          %v2010 = vunpack.c.l.b16 %v1914
          %v2011 = vunpack.c.l.b16 %v1915
          %v2012 = vunpack.c.l.b16 %v1916
          %v2013 = vunpack.c.l.b16 %v1917
          %v2014 = vunpack.c.l.b16 %v1918
          %v2015 = vunpack.c.l.b16 %v1919
          %v2016 = vunpack.c.l.b16 %v1920
          %v2017 = vunpack.c.l.b16 %v1921
          %v2018 = vunpack.c.l.b16 %v1922
          %v2019 = vunpack.c.l.b16 %v1923
          %v2020 = vunpack.c.l.b16 %v1924
          %v2021 = vunpack.c.l.b16 %v1925
          %v2022 = vunpack.c.l.b16 %v1926
          %v2023 = vunpack.c.l.b16 %v1927
          %v2024 = vunpack.c.l.b16 %v1928
          %v2025 = vunpack.c.l.b16 %v1929
          %v2026 = vunpack.c.l.b16 %v1930
          %v2027 = vunpack.c.l.b16 %v1931
          %v2028 = vpack.c.b16 %v1981, %v1980
          %v2029 = vpack.c.b16 %v1983, %v1982
          %v2030 = vpack.c.b16 %v1985, %v1984
          %v2031 = vpack.c.b16 %v1987, %v1986
          %v2032 = vpack.c.b16 %v1989, %v1988
          %v2033 = vpack.c.b16 %v1991, %v1990
          %v2034 = vpack.c.b16 %v1993, %v1992
          %v2035 = vpack.c.b16 %v1995, %v1994
          %v2036 = vpack.c.b16 %v1997, %v1996
          %v2037 = vpack.c.b16 %v1999, %v1998
          %v2038 = vpack.c.b16 %v2001, %v2000
          %v2039 = vpack.c.b16 %v2003, %v2002
          %v2040 = vpack.c.b16 %v2005, %v2004
          %v2041 = vpack.c.b16 %v2007, %v2006
          %v2042 = vpack.c.b16 %v2009, %v2008
          %v2043 = vpack.c.b16 %v2011, %v2010
          %v2044 = vpack.c.b16 %v2013, %v2012
          %v2045 = vpack.c.b16 %v2015, %v2014
          %v2046 = vpack.c.b16 %v2017, %v2016
          %v2047 = vpack.c.b16 %v2019, %v2018
          %v2048 = vpack.c.b16 %v2021, %v2020
          %v2049 = vpack.c.b16 %v2023, %v2022
          %v2050 = vpack.c.b16 %v2025, %v2024
          %v2051 = vpack.c.b16 %v2027, %v2026
          %2076 = vmatprep.subr.bf16.mxu0 0
          %2077 = vmatpush1.bf16.msra.mxu0 %v2028
          %2078 = vmatprep.subr.bf16.mxu0 0
          %2079 = vmatpush1.bf16.msra.mxu0 %v2029
          %2080 = vmatprep.subr.bf16.mxu0 0
          %2081 = vmatpush1.bf16.msra.mxu0 %v2030
          %2082 = vmatprep.subr.bf16.mxu0 0
          %2083 = vmatpush1.bf16.msra.mxu0 %v2031
          %2084 = vmatprep.subr.bf16.mxu0 0
          %2085 = vmatpush1.bf16.msra.mxu0 %v2032
          %2086 = vmatprep.subr.bf16.mxu0 0
          %2087 = vmatpush1.bf16.msra.mxu0 %v2033
          %2088 = vmatprep.subr.bf16.mxu0 0
          %2089 = vmatpush1.bf16.msra.mxu0 %v2034
          %2090 = vmatprep.subr.bf16.mxu0 0
          %2091 = vmatpush1.bf16.msra.mxu0 %v2035
          %2092 = vmatprep.subr.bf16.mxu0 0
          %2093 = vmatpush1.bf16.msra.mxu0 %v2036
          %2094 = vmatprep.subr.bf16.mxu0 0
          %2095 = vmatpush1.bf16.msra.mxu0 %v2037
          %2096 = vmatprep.subr.bf16.mxu0 0
          %2097 = vmatpush1.bf16.msra.mxu0 %v2038
          %2098 = vmatprep.subr.bf16.mxu0 0
          %2099 = vmatpush1.bf16.msra.mxu0 %v2039
          %2100 = vmatprep.subr.bf16.mxu0 0
          %2101 = vmatpush1.bf16.msra.mxu0 %v2040
          %2102 = vmatprep.subr.bf16.mxu0 0
          %2103 = vmatpush1.bf16.msra.mxu0 %v2041
          %2104 = vmatprep.subr.bf16.mxu0 0
          %2105 = vmatpush1.bf16.msra.mxu0 %v2042
          %2106 = vmatprep.subr.bf16.mxu0 0
          %2107 = vmatpush1.bf16.msra.mxu0 %v2043
          %2108 = vmatprep.mubr.bf16.mxu0 %v1860
          %2109 = vmatmul.mubr.bf16.gmra.mrb[0].mxu0 %v1859
          %v2110 = vpop.f32.mrb[0].mxu0
          %v2111 = vadd.f32 0.0, %v2110
          %v2112 = vpop.f32.mrb[0].mxu0
          %v2113 = vpop.f32.mrb[0].mxu0
          %v2114 = vadd.f32 0.0, %v2113
          %v2115 = vpop.f32.mrb[0].mxu0
          %2116 = vmatprep.mubr.bf16.mxu0 %v1863
          %2117 = vmatmul.mubr.bf16.gmra.mrb[0].mxu0 %v1862
          %v2118 = vpop.f32.mrb[0].mxu0
          %v2119 = vadd.f32 0.0, %v2118
          %v2120 = vpop.f32.mrb[0].mxu0
          %v2121 = vpop.f32.mrb[0].mxu0
          %v2122 = vadd.f32 0.0, %v2121
          %v2123 = vpop.f32.mrb[0].mxu0
          %2124 = vmatprep.mubr.bf16.mxu0 %v1866
          %2125 = vmatmul.mubr.bf16.gmra.mrb[0].mxu0 %v1865
          %v2126 = vpop.f32.mrb[0].mxu0
          %v2127 = vadd.f32 0.0, %v2126
          %v2128 = vpop.f32.mrb[0].mxu0
          %v2129 = vpop.f32.mrb[0].mxu0
          %v2130 = vadd.f32 0.0, %v2129
          %v2131 = vpop.f32.mrb[0].mxu0
          %2132 = vmatprep.mubr.bf16.mxu0 %v1869
          %2133 = vmatmul.mubr.bf16.gmra.mrb[0].mxu0 %v1868
          %v2134 = vpop.f32.mrb[0].mxu0
          %v2135 = vadd.f32 0.0, %v2134
          %v2136 = vpop.f32.mrb[0].mxu0
          %v2137 = vpop.f32.mrb[0].mxu0
          %v2138 = vadd.f32 0.0, %v2137
          %v2139 = vpop.f32.mrb[0].mxu0
          %2140 = vmatprep.mubr.bf16.mxu0 %v1872
          %2141 = vmatmul.mubr.bf16.gmra.mrb[0].mxu0 %v1871
          %v2142 = vpop.f32.mrb[0].mxu0
          %v2143 = vadd.f32 0.0, %v2142
          %v2144 = vpop.f32.mrb[0].mxu0
          %v2145 = vpop.f32.mrb[0].mxu0
          %v2146 = vadd.f32 0.0, %v2145
          %v2147 = vpop.f32.mrb[0].mxu0
          %2148 = vmatprep.mubr.bf16.mxu0 %v1875
          %2149 = vmatmul.mubr.bf16.gmra.mrb[0].mxu0 %v1874
          %v2150 = vpop.f32.mrb[0].mxu0
          %v2151 = vadd.f32 0.0, %v2150
          %v2152 = vpop.f32.mrb[0].mxu0
          %v2153 = vpop.f32.mrb[0].mxu0
          %v2154 = vadd.f32 0.0, %v2153
          %v2155 = vpop.f32.mrb[0].mxu0
          %2156 = vmatprep.mubr.bf16.mxu0 %v1878
          %2157 = vmatmul.mubr.bf16.gmra.mrb[0].mxu0 %v1877
          %v2158 = vpop.f32.mrb[0].mxu0
          %v2159 = vadd.f32 0.0, %v2158
          %v2160 = vpop.f32.mrb[0].mxu0
          %v2161 = vpop.f32.mrb[0].mxu0
          %v2162 = vadd.f32 0.0, %v2161
          %v2163 = vpop.f32.mrb[0].mxu0
          %2164 = vmatprep.mubr.bf16.mxu0 %v1881
          %2165 = vmatmul.mubr.bf16.gmra.mrb[0].mxu0 %v1880
          %v2166 = vpop.f32.mrb[0].mxu0
          %v2167 = vadd.f32 0.0, %v2166
          %v2168 = vpop.f32.mrb[0].mxu0
          %v2169 = vpop.f32.mrb[0].mxu0
          %v2170 = vadd.f32 0.0, %v2169
          %v2171 = vpop.f32.mrb[0].mxu0
          %2172 = vdwg.mxu0
          %2173 = vmatprep.subr.bf16.mxu0 0
          %2174 = vmatpush1.bf16.msra.mxu0 %v2044
          %2175 = vmatprep.subr.bf16.mxu0 0
          %2176 = vmatpush1.bf16.msra.mxu0 %v2045
          %2177 = vmatprep.subr.bf16.mxu0 0
          %2178 = vmatpush1.bf16.msra.mxu0 %v2046
          %2179 = vmatprep.subr.bf16.mxu0 0
          %2180 = vmatpush1.bf16.msra.mxu0 %v2047
          %2181 = vmatprep.subr.bf16.mxu0 0
          %2182 = vmatpush1.bf16.msra.mxu0 %v2048
          %2183 = vmatprep.subr.bf16.mxu0 0
          %2184 = vmatpush1.bf16.msra.mxu0 %v2049
          %2185 = vmatprep.subr.bf16.mxu0 0
          %2186 = vmatpush1.bf16.msra.mxu0 %v2050
          %2187 = vmatprep.subr.bf16.mxu0 0
          %2188 = vmatpush1.bf16.msra.mxu0 %v2051
          %2189 = vmatprep.subr.bf16.mxu0 0
          %2190 = vmatpush1.bf16.msra.mxu0 0
          %2191 = vmatprep.subr.bf16.mxu0 0
          %2192 = vmatpush1.bf16.msra.mxu0 0
          %2193 = vmatprep.subr.bf16.mxu0 0
          %2194 = vmatpush1.bf16.msra.mxu0 0
          %2195 = vmatprep.subr.bf16.mxu0 0
          %2196 = vmatpush1.bf16.msra.mxu0 0
          %2197 = vmatprep.subr.bf16.mxu0 0
          %2198 = vmatpush1.bf16.msra.mxu0 0
          %2199 = vmatprep.subr.bf16.mxu0 0
          %2200 = vmatpush1.bf16.msra.mxu0 0
          %2201 = vmatprep.subr.bf16.mxu0 0
          %2202 = vmatpush1.bf16.msra.mxu0 0
          %2203 = vmatprep.subr.bf16.mxu0 0
          %2204 = vmatpush1.bf16.msra.mxu0 0
          %2205 = vmatprep.mubr.bf16.mxu0 0
          %2206 = vmatmul.mubr.bf16.gmra.mrb[0].mxu0 %v1861
          %v2207 = vpop.f32.mrb[0].mxu0
          %v2208 = vadd.f32 %v2111, %v2207
          %v2209 = vpop.f32.mrb[0].mxu0
          %v2210 = vpop.f32.mrb[0].mxu0
          %v2211 = vadd.f32 %v2114, %v2210
          %v2212 = vpop.f32.mrb[0].mxu0
          %2213 = vmatprep.mubr.bf16.mxu0 0
          %2214 = vmatmul.mubr.bf16.gmra.mrb[0].mxu0 %v1864
          %v2215 = vpop.f32.mrb[0].mxu0
          %v2216 = vadd.f32 %v2119, %v2215
          %v2217 = vpop.f32.mrb[0].mxu0
          %v2218 = vpop.f32.mrb[0].mxu0
          %v2219 = vadd.f32 %v2122, %v2218
          %v2220 = vpop.f32.mrb[0].mxu0
          %2221 = vmatprep.mubr.bf16.mxu0 0
          %2222 = vmatmul.mubr.bf16.gmra.mrb[0].mxu0 %v1867
          %v2223 = vpop.f32.mrb[0].mxu0
          %v2224 = vadd.f32 %v2127, %v2223
          %v2225 = vpop.f32.mrb[0].mxu0
          %v2226 = vpop.f32.mrb[0].mxu0
          %v2227 = vadd.f32 %v2130, %v2226
          %v2228 = vpop.f32.mrb[0].mxu0
          %2229 = vmatprep.mubr.bf16.mxu0 0
          %2230 = vmatmul.mubr.bf16.gmra.mrb[0].mxu0 %v1870
          %v2231 = vpop.f32.mrb[0].mxu0
          %v2232 = vadd.f32 %v2135, %v2231
          %v2233 = vpop.f32.mrb[0].mxu0
          %v2234 = vpop.f32.mrb[0].mxu0
          %v2235 = vadd.f32 %v2138, %v2234
          %v2236 = vpop.f32.mrb[0].mxu0
          %2237 = vmatprep.mubr.bf16.mxu0 0
          %2238 = vmatmul.mubr.bf16.gmra.mrb[0].mxu0 %v1873
          %v2239 = vpop.f32.mrb[0].mxu0
          %v2240 = vadd.f32 %v2143, %v2239
          %v2241 = vpop.f32.mrb[0].mxu0
          %v2242 = vpop.f32.mrb[0].mxu0
          %v2243 = vadd.f32 %v2146, %v2242
          %v2244 = vpop.f32.mrb[0].mxu0
          %2245 = vmatprep.mubr.bf16.mxu0 0
          %2246 = vmatmul.mubr.bf16.gmra.mrb[0].mxu0 %v1876
          %v2247 = vpop.f32.mrb[0].mxu0
          %v2248 = vadd.f32 %v2151, %v2247
          %v2249 = vpop.f32.mrb[0].mxu0
          %v2250 = vpop.f32.mrb[0].mxu0
          %v2251 = vadd.f32 %v2154, %v2250
          %v2252 = vpop.f32.mrb[0].mxu0
          %2253 = vmatprep.mubr.bf16.mxu0 0
          %2254 = vmatmul.mubr.bf16.gmra.mrb[0].mxu0 %v1879
          %v2255 = vpop.f32.mrb[0].mxu0
          %v2256 = vadd.f32 %v2159, %v2255
          %v2257 = vpop.f32.mrb[0].mxu0
          %v2258 = vpop.f32.mrb[0].mxu0
          %v2259 = vadd.f32 %v2162, %v2258
          %v2260 = vpop.f32.mrb[0].mxu0
          %2261 = vmatprep.mubr.bf16.mxu0 0
          %2262 = vmatmul.mubr.bf16.gmra.mrb[0].mxu0 %v1882
          %v2263 = vpop.f32.mrb[0].mxu0
          %v2264 = vadd.f32 %v2167, %v2263
          %v2265 = vpop.f32.mrb[0].mxu0
          %v2266 = vpop.f32.mrb[0].mxu0
          %v2267 = vadd.f32 %v2170, %v2266
          %v2268 = vpop.f32.mrb[0].mxu0
          %2269 = vdwg.mxu0
          %v2270 = vadd.f32 %v1793, %v2208
          %v2271 = vadd.f32 %v1796, %v2211
          %v2272 = vadd.f32 %v1801, %v2216
          %v2273 = vadd.f32 %v1804, %v2219
          %v2274 = vadd.f32 %v1809, %v2224
          %v2275 = vadd.f32 %v1812, %v2227
          %v2276 = vadd.f32 %v1817, %v2232
          %v2277 = vadd.f32 %v1820, %v2235
          %v2278 = vadd.f32 %v1825, %v2240
          %v2279 = vadd.f32 %v1828, %v2243
          %v2280 = vadd.f32 %v1833, %v2248
          %v2281 = vadd.f32 %v1836, %v2251
          %v2282 = vadd.f32 %v1841, %v2256
          %v2283 = vadd.f32 %v1844, %v2259
          %v2284 = vadd.f32 %v1849, %v2264
          %v2285 = vadd.f32 %v1852, %v2267
          %v2286 = vld [vmem:[%s4] sm:$0x1]
          %v2288 = vlaneseq
          %v2289 = vshrl.u32 %v2288, 7
          %v2290 = vsub.s32 0, %v2289
          %v2291 = vrot.slane %v2286, %v2290
          %v2293 = vadd.f32 %v2270, %v2291
          %v2294 = vadd.f32 %v2271, %v2291
          %v2295 = vadd.f32 %v2272, %v2291
          %v2296 = vadd.f32 %v2273, %v2291
          %v2297 = vadd.f32 %v2274, %v2291
          %v2298 = vadd.f32 %v2275, %v2291
          %v2299 = vadd.f32 %v2276, %v2291
          %v2300 = vadd.f32 %v2277, %v2291
          %v2301 = vadd.f32 %v2278, %v2291
          %v2302 = vadd.f32 %v2279, %v2291
          %v2303 = vadd.f32 %v2280, %v2291
          %v2304 = vadd.f32 %v2281, %v2291
          %v2305 = vadd.f32 %v2282, %v2291
          %v2306 = vadd.f32 %v2283, %v2291
          %v2307 = vadd.f32 %v2284, %v2291
          %v2308 = vadd.f32 %v2285, %v2291
          %v2309 = vmax.f32 %v2293, 0.0
          %v2310 = vmax.f32 %v2294, 0.0
          %v2311 = vmax.f32 %v2295, 0.0
          %v2312 = vmax.f32 %v2296, 0.0
          %v2313 = vmax.f32 %v2297, 0.0
          %v2314 = vmax.f32 %v2298, 0.0
          %v2315 = vmax.f32 %v2299, 0.0
          %v2316 = vmax.f32 %v2300, 0.0
          %v2317 = vmax.f32 %v2301, 0.0
          %v2318 = vmax.f32 %v2302, 0.0
          %v2319 = vmax.f32 %v2303, 0.0
          %v2320 = vmax.f32 %v2304, 0.0
          %v2321 = vmax.f32 %v2305, 0.0
          %v2322 = vmax.f32 %v2306, 0.0
          %v2323 = vmax.f32 %v2307, 0.0
          %v2324 = vmax.f32 %v2308, 0.0
          %v2325 = vpack.c.bf16 %v2310, %v2309
          %v2326 = vpack.c.bf16 %v2312, %v2311
          %v2327 = vpack.c.bf16 %v2314, %v2313
          %v2328 = vpack.c.bf16 %v2316, %v2315
          %v2329 = vpack.c.bf16 %v2318, %v2317
          %v2330 = vpack.c.bf16 %v2320, %v2319
          %v2331 = vpack.c.bf16 %v2322, %v2321
          %v2332 = vpack.c.bf16 %v2324, %v2323
          %v2333 = vld [vmem:[#allocation9] sm:$0xf]
          %v2334 = vld [vmem:[#allocation9 + $0x4] sm:$0xf]
          %v2335 = vld [vmem:[#allocation9 + $0x8] sm:$0xf]
          %v2336 = vld [vmem:[#allocation9 + $0xc] sm:$0xf]
          %v2337 = vld [vmem:[#allocation9 + $0x10] sm:$0xf]
          %v2338 = vld [vmem:[#allocation9 + $0x14] sm:$0xf]
          %v2339 = vld [vmem:[#allocation9 + $0x18] sm:$0xf]
          %v2340 = vld [vmem:[#allocation9 + $0x1c] sm:$0xf]
          %v2341 = vld [vmem:[#allocation9 + $0x20] sm:$0xf]
          %v2342 = vld [vmem:[#allocation9 + $0x24] sm:$0xf]
          %v2343 = vld [vmem:[#allocation9 + $0x28] sm:$0xf]
          %v2344 = vld [vmem:[#allocation9 + $0x2c] sm:$0xf]
          %v2345 = vld [vmem:[#allocation9 + $0x30] sm:$0xf]
          %v2346 = vld [vmem:[#allocation9 + $0x34] sm:$0xf]
          %v2347 = vld [vmem:[#allocation9 + $0x38] sm:$0xf]
          %v2348 = vld [vmem:[#allocation9 + $0x3c] sm:$0xf]
          %s2349 = smul.u32 %s1026, 2
          %s2350 = smul.addr %s2349, 4
          %s2351 = scalar_lea.vmem %s298, %s2350 [#allocation3]
          %v2352 = vld [vmem:[%s2351] sm:$0xf]
          %v2353 = vld [vmem:[%s2351 + $0x4] sm:$0xf]
          %v2354 = vld [vmem:[%s2351 + $0x8] sm:$0xf]
          %v2355 = vld [vmem:[%s2351 + $0xc] sm:$0xf]
          %v2356 = vld [vmem:[%s2351 + $0x10] sm:$0xf]
          %v2357 = vld [vmem:[%s2351 + $0x14] sm:$0xf]
          %v2358 = vld [vmem:[%s2351 + $0x18] sm:$0xf]
          %v2359 = vld [vmem:[%s2351 + $0x1c] sm:$0xf]
          %v2360 = vld [vmem:[%s2351 + $0x20] sm:$0xf]
          %v2361 = vld [vmem:[%s2351 + $0x24] sm:$0xf]
          %v2362 = vld [vmem:[%s2351 + $0x28] sm:$0xf]
          %v2363 = vld [vmem:[%s2351 + $0x2c] sm:$0xf]
          %v2364 = vld [vmem:[%s2351 + $0x30] sm:$0xf]
          %v2365 = vld [vmem:[%s2351 + $0x34] sm:$0xf]
          %v2366 = vld [vmem:[%s2351 + $0x38] sm:$0xf]
          %v2367 = vld [vmem:[%s2351 + $0x3c] sm:$0xf]
          %v2368 = vunpack.c.l.bf16 %v2352
          %v2369 = vunpack.c.l.bf16 %v2353
          %v2370 = vunpack.c.l.bf16 %v2354
          %v2371 = vunpack.c.l.bf16 %v2355
          %v2372 = vunpack.c.l.bf16 %v2356
          %v2373 = vunpack.c.l.bf16 %v2357
          %v2374 = vunpack.c.l.bf16 %v2358
          %v2375 = vunpack.c.l.bf16 %v2359
          %v2376 = vunpack.c.l.bf16 %v2360
          %v2377 = vunpack.c.l.bf16 %v2361
          %v2378 = vunpack.c.l.bf16 %v2362
          %v2379 = vunpack.c.l.bf16 %v2363
          %v2380 = vunpack.c.l.bf16 %v2364
          %v2381 = vunpack.c.l.bf16 %v2365
          %v2382 = vunpack.c.l.bf16 %v2366
          %v2383 = vunpack.c.l.bf16 %v2367
          %v2384 = vld [vmem:[%s6] sm:$0x1]
          %v2386 = vlaneseq
          %v2387 = vshrl.u32 %v2386, 7
          %v2388 = vsub.s32 0, %v2387
          %v2389 = vrot.slane %v2384, %v2388
          %v2407 = vunpack.c.l.b16 %v2333
          %v2408 = vunpack.c.l.b16 %v2334
          %v2409 = vunpack.c.l.b16 %v2335
          %v2410 = vunpack.c.l.b16 %v2336
          %v2411 = vunpack.c.l.b16 %v2337
          %v2412 = vunpack.c.l.b16 %v2338
          %v2413 = vunpack.c.l.b16 %v2339
          %v2414 = vunpack.c.l.b16 %v2340
          %v2415 = vunpack.c.l.b16 %v2341
          %v2416 = vunpack.c.l.b16 %v2342
          %v2417 = vunpack.c.l.b16 %v2343
          %v2418 = vunpack.c.l.b16 %v2344
          %v2419 = vunpack.c.l.b16 %v2345
          %v2420 = vunpack.c.l.b16 %v2346
          %v2421 = vunpack.c.l.b16 %v2347
          %v2422 = vunpack.c.l.b16 %v2348
          %v2423 = vpack.c.b16 %v2408, %v2407
          %v2424 = vpack.c.b16 %v2410, %v2409
          %v2425 = vpack.c.b16 %v2412, %v2411
          %v2426 = vpack.c.b16 %v2414, %v2413
          %v2427 = vpack.c.b16 %v2416, %v2415
          %v2428 = vpack.c.b16 %v2418, %v2417
          %v2429 = vpack.c.b16 %v2420, %v2419
          %v2430 = vpack.c.b16 %v2422, %v2421
          %2439 = vmatprep.subr.bf16.mxu0 0
          %2440 = vmatpush1.bf16.msra.mxu0 %v2423
          %2441 = vmatprep.subr.bf16.mxu0 0
          %2442 = vmatpush1.bf16.msra.mxu0 %v2424
          %2443 = vmatprep.subr.bf16.mxu0 0
          %2444 = vmatpush1.bf16.msra.mxu0 %v2425
          %2445 = vmatprep.subr.bf16.mxu0 0
          %2446 = vmatpush1.bf16.msra.mxu0 %v2426
          %2447 = vmatprep.subr.bf16.mxu0 0
          %2448 = vmatpush1.bf16.msra.mxu0 %v2427
          %2449 = vmatprep.subr.bf16.mxu0 0
          %2450 = vmatpush1.bf16.msra.mxu0 %v2428
          %2451 = vmatprep.subr.bf16.mxu0 0
          %2452 = vmatpush1.bf16.msra.mxu0 %v2429
          %2453 = vmatprep.subr.bf16.mxu0 0
          %2454 = vmatpush1.bf16.msra.mxu0 %v2430
          %2455 = vmatprep.subr.bf16.mxu0 0
          %2456 = vmatpush1.bf16.msra.mxu0 0
          %2457 = vmatprep.subr.bf16.mxu0 0
          %2458 = vmatpush1.bf16.msra.mxu0 0
          %2459 = vmatprep.subr.bf16.mxu0 0
          %2460 = vmatpush1.bf16.msra.mxu0 0
          %2461 = vmatprep.subr.bf16.mxu0 0
          %2462 = vmatpush1.bf16.msra.mxu0 0
          %2463 = vmatprep.subr.bf16.mxu0 0
          %2464 = vmatpush1.bf16.msra.mxu0 0
          %2465 = vmatprep.subr.bf16.mxu0 0
          %2466 = vmatpush1.bf16.msra.mxu0 0
          %2467 = vmatprep.subr.bf16.mxu0 0
          %2468 = vmatpush1.bf16.msra.mxu0 0
          %2469 = vmatprep.subr.bf16.mxu0 0
          %2470 = vmatpush1.bf16.msra.mxu0 0
          %2471 = vmatprep.mubr.bf16.mxu0 0
          %2472 = vmatmul.mubr.bf16.gmra.mrb[0].mxu0 %v2325
          %v2473 = vpop.f32.mrb[0].mxu0
          %v2474 = vadd.f32 %v2389, %v2473
          %v2475 = vpop.f32.mrb[0].mxu0
          %v2476 = vpop.f32.mrb[0].mxu0
          %v2477 = vadd.f32 %v2389, %v2476
          %v2478 = vpop.f32.mrb[0].mxu0
          %2479 = vmatprep.mubr.bf16.mxu0 0
          %2480 = vmatmul.mubr.bf16.gmra.mrb[0].mxu0 %v2326
          %v2481 = vpop.f32.mrb[0].mxu0
          %v2482 = vadd.f32 %v2389, %v2481
          %v2483 = vpop.f32.mrb[0].mxu0
          %v2484 = vpop.f32.mrb[0].mxu0
          %v2485 = vadd.f32 %v2389, %v2484
          %v2486 = vpop.f32.mrb[0].mxu0
          %2487 = vmatprep.mubr.bf16.mxu0 0
          %2488 = vmatmul.mubr.bf16.gmra.mrb[0].mxu0 %v2327
          %v2489 = vpop.f32.mrb[0].mxu0
          %v2490 = vadd.f32 %v2389, %v2489
          %v2491 = vpop.f32.mrb[0].mxu0
          %v2492 = vpop.f32.mrb[0].mxu0
          %v2493 = vadd.f32 %v2389, %v2492
          %v2494 = vpop.f32.mrb[0].mxu0
          %2495 = vmatprep.mubr.bf16.mxu0 0
          %2496 = vmatmul.mubr.bf16.gmra.mrb[0].mxu0 %v2328
          %v2497 = vpop.f32.mrb[0].mxu0
          %v2498 = vadd.f32 %v2389, %v2497
          %v2499 = vpop.f32.mrb[0].mxu0
          %v2500 = vpop.f32.mrb[0].mxu0
          %v2501 = vadd.f32 %v2389, %v2500
          %v2502 = vpop.f32.mrb[0].mxu0
          %2503 = vmatprep.mubr.bf16.mxu0 0
          %2504 = vmatmul.mubr.bf16.gmra.mrb[0].mxu0 %v2329
          %v2505 = vpop.f32.mrb[0].mxu0
          %v2506 = vadd.f32 %v2389, %v2505
          %v2507 = vpop.f32.mrb[0].mxu0
          %v2508 = vpop.f32.mrb[0].mxu0
          %v2509 = vadd.f32 %v2389, %v2508
          %v2510 = vpop.f32.mrb[0].mxu0
          %2511 = vmatprep.mubr.bf16.mxu0 0
          %2512 = vmatmul.mubr.bf16.gmra.mrb[0].mxu0 %v2330
          %v2513 = vpop.f32.mrb[0].mxu0
          %v2514 = vadd.f32 %v2389, %v2513
          %v2515 = vpop.f32.mrb[0].mxu0
          %v2516 = vpop.f32.mrb[0].mxu0
          %v2517 = vadd.f32 %v2389, %v2516
          %v2518 = vpop.f32.mrb[0].mxu0
          %2519 = vmatprep.mubr.bf16.mxu0 0
          %2520 = vmatmul.mubr.bf16.gmra.mrb[0].mxu0 %v2331
          %v2521 = vpop.f32.mrb[0].mxu0
          %v2522 = vadd.f32 %v2389, %v2521
          %v2523 = vpop.f32.mrb[0].mxu0
          %v2524 = vpop.f32.mrb[0].mxu0
          %v2525 = vadd.f32 %v2389, %v2524
          %v2526 = vpop.f32.mrb[0].mxu0
          %2527 = vmatprep.mubr.bf16.mxu0 0
          %2528 = vmatmul.mubr.bf16.gmra.mrb[0].mxu0 %v2332
          %v2529 = vpop.f32.mrb[0].mxu0
          %v2530 = vadd.f32 %v2389, %v2529
          %v2531 = vpop.f32.mrb[0].mxu0
          %v2532 = vpop.f32.mrb[0].mxu0
          %v2533 = vadd.f32 %v2389, %v2532
          %v2534 = vpop.f32.mrb[0].mxu0
          %2535 = vdwg.mxu0
          %v2536 = vadd.f32 %v2474, %v2368
          %v2537 = vadd.f32 %v2477, %v2369
          %v2538 = vadd.f32 %v2482, %v2370
          %v2539 = vadd.f32 %v2485, %v2371
          %v2540 = vadd.f32 %v2490, %v2372
          %v2541 = vadd.f32 %v2493, %v2373
          %v2542 = vadd.f32 %v2498, %v2374
          %v2543 = vadd.f32 %v2501, %v2375
          %v2544 = vadd.f32 %v2506, %v2376
          %v2545 = vadd.f32 %v2509, %v2377
          %v2546 = vadd.f32 %v2514, %v2378
          %v2547 = vadd.f32 %v2517, %v2379
          %v2548 = vadd.f32 %v2522, %v2380
          %v2549 = vadd.f32 %v2525, %v2381
          %v2550 = vadd.f32 %v2530, %v2382
          %v2551 = vadd.f32 %v2533, %v2383
          %v2552 = vmax.f32 %v2536, 0.0
          %v2553 = vmax.f32 %v2537, 0.0
          %v2554 = vmax.f32 %v2538, 0.0
          %v2555 = vmax.f32 %v2539, 0.0
          %v2556 = vmax.f32 %v2540, 0.0
          %v2557 = vmax.f32 %v2541, 0.0
          %v2558 = vmax.f32 %v2542, 0.0
          %v2559 = vmax.f32 %v2543, 0.0
          %v2560 = vmax.f32 %v2544, 0.0
          %v2561 = vmax.f32 %v2545, 0.0
          %v2562 = vmax.f32 %v2546, 0.0
          %v2563 = vmax.f32 %v2547, 0.0
          %v2564 = vmax.f32 %v2548, 0.0
          %v2565 = vmax.f32 %v2549, 0.0
          %v2566 = vmax.f32 %v2550, 0.0
          %v2567 = vmax.f32 %v2551, 0.0
          %v2568 = vpack.c.bf16 %v2553, %v2552
          %v2569 = vpack.c.bf16 %v2555, %v2554
          %v2570 = vpack.c.bf16 %v2557, %v2556
          %v2571 = vpack.c.bf16 %v2559, %v2558
          %v2572 = vpack.c.bf16 %v2561, %v2560
          %v2573 = vpack.c.bf16 %v2563, %v2562
          %v2574 = vpack.c.bf16 %v2565, %v2564
          %v2575 = vpack.c.bf16 %v2567, %v2566
          %v2584 = vunpack.c.l.b16 %v2568
          %v2585 = vunpack.c.h.b16 %v2568
          %v2586 = vunpack.c.l.b16 %v2569
          %v2587 = vunpack.c.h.b16 %v2569
          %v2588 = vunpack.c.l.b16 %v2570
          %v2589 = vunpack.c.h.b16 %v2570
          %v2590 = vunpack.c.l.b16 %v2571
          %v2591 = vunpack.c.h.b16 %v2571
          %v2592 = vunpack.c.l.b16 %v2572
          %v2593 = vunpack.c.h.b16 %v2572
          %v2594 = vunpack.c.l.b16 %v2573
          %v2595 = vunpack.c.h.b16 %v2573
          %v2596 = vunpack.c.l.b16 %v2574
          %v2597 = vunpack.c.h.b16 %v2574
          %v2598 = vunpack.c.l.b16 %v2575
          %v2599 = vunpack.c.h.b16 %v2575
          %v2600 = vpack.c.b16 %v2584, %v2584
          %v2601 = vpack.c.b16 %v2585, %v2585
          %v2602 = vpack.c.b16 %v2586, %v2586
          %v2603 = vpack.c.b16 %v2587, %v2587
          %v2604 = vpack.c.b16 %v2588, %v2588
          %v2605 = vpack.c.b16 %v2589, %v2589
          %v2606 = vpack.c.b16 %v2590, %v2590
          %v2607 = vpack.c.b16 %v2591, %v2591
          %v2608 = vpack.c.b16 %v2592, %v2592
          %v2609 = vpack.c.b16 %v2593, %v2593
          %v2610 = vpack.c.b16 %v2594, %v2594
          %v2611 = vpack.c.b16 %v2595, %v2595
          %v2612 = vpack.c.b16 %v2596, %v2596
          %v2613 = vpack.c.b16 %v2597, %v2597
          %v2614 = vpack.c.b16 %v2598, %v2598
          %v2615 = vpack.c.b16 %v2599, %v2599
          %s2632 = smul.addr %s2349, 4
          %s2633 = scalar_lea.vmem %s340, %s2632 [#allocation11]
          %2634 = vst [vmem:[%s2633] sm:$0xf] %v2600
          %2635 = vst [vmem:[%s2633 + $0x4] sm:$0xf] %v2601
          %2636 = vst [vmem:[%s2633 + $0x8] sm:$0xf] %v2602
          %2637 = vst [vmem:[%s2633 + $0xc] sm:$0xf] %v2603
          %2638 = vst [vmem:[%s2633 + $0x10] sm:$0xf] %v2604
          %2639 = vst [vmem:[%s2633 + $0x14] sm:$0xf] %v2605
          %2640 = vst [vmem:[%s2633 + $0x18] sm:$0xf] %v2606
          %2641 = vst [vmem:[%s2633 + $0x1c] sm:$0xf] %v2607
          %2642 = vst [vmem:[%s2633 + $0x20] sm:$0xf] %v2608
          %2643 = vst [vmem:[%s2633 + $0x24] sm:$0xf] %v2609
          %2644 = vst [vmem:[%s2633 + $0x28] sm:$0xf] %v2610
          %2645 = vst [vmem:[%s2633 + $0x2c] sm:$0xf] %v2611
          %2646 = vst [vmem:[%s2633 + $0x30] sm:$0xf] %v2612
          %2647 = vst [vmem:[%s2633 + $0x34] sm:$0xf] %v2613
          %2648 = vst [vmem:[%s2633 + $0x38] sm:$0xf] %v2614
          %2649 = vst [vmem:[%s2633 + $0x3c] sm:$0xf] %v2615
        $region69: #{tpu_custom_call.1} parent=47 // loop_footer
          %s1025 = sadd.s32 1, %s1021
        $region70: #{tpu_custom_call.1} parent=47 // loop_footer_branch
          %1020 = sbr.rel target = $region66
        $region71: #{tpu_custom_call.1} parent=47 // loop_exit
          _
        %s2650 = sand.u32 %s186, 1
        %s2651 = scalar_lea.sflag [#allocation5], %s2650
        %s2652 = sand.u32 %s186, 1
        %s2653 = smul.addr %s2652, 128
        %s2654 = scalar_lea.vmem [#allocation11], %s2653
        // Predicated region
        $region72: #{tpu_custom_call.1} parent=47 // pred_check
          %p2655 = pneg %p196
        $region73: #{tpu_custom_call.1} parent=47 // pred_check_branch
          %2657 = sbr.rel (%p2655) target = $region75
        $region74: #{tpu_custom_call.1} parent=47 // pred_region
          %s2659 = ssub.s32 2048, 2048
          %2660 = vsyncadd %s2651, %s2659
          %s2661 = smul.addr %s26, 32
          %s2662 = smul.addr %s2661, 64
          %s2663 = scalar_lea.hbm %s7, %s2662
          %s2664 = sshll.u32 %s2654, 4
          %s2665 = int_to_ptr.vmem [resolvable:$true] %s2664
          %2670 = dma.vmem_to_hbm [thread:$0]  %s2665, 2048, %s2663, %s2651, 64, 64, 4
        $region75: #{tpu_custom_call.1} parent=47 // pred_fallthru
          _
      $region48: #{tpu_custom_call.1} parent=5 // pred_fallthru
        _
      %p2671 = scmp.le.s32.totalorder 2, %s21
      // Predicated region
      $region76: #{tpu_custom_call.1} parent=5 // pred_check
        %p2672 = pneg %p2671
      $region77: #{tpu_custom_call.1} parent=5 // pred_check_branch
        %2674 = sbr.rel (%p2672) target = $region79
      $region78: #{tpu_custom_call.1} parent=5 // pred_region
        %s2675 = ssub.s32 %s21, 2
        // Predicated region
        $region80: #{tpu_custom_call.1} parent=78 // pred_check
          %p2676 = pneg %p202
        $region81: #{tpu_custom_call.1} parent=78 // pred_check_branch
          %2678 = sbr.rel (%p2676) target = $region83
        $region82: #{tpu_custom_call.1} parent=78 // pred_region
          %s2679 = sand.u32 %s187, 1
          %s2680 = scalar_lea.sflag [#allocation5], %s2679
          %s2681 = sand.u32 %s187, 1
          %s2682 = smul.addr %s2681, 128
          %s2683 = scalar_lea.vmem [#allocation11], %s2682
          %2684 = dma.done %s2680, 2048
        $region83: #{tpu_custom_call.1} parent=78 // pred_fallthru
          _
      $region79: #{tpu_custom_call.1} parent=5 // pred_fallthru
        _
    $region6: #{tpu_custom_call.1} parent=1 // loop_footer
      %s25 = sadd.s32 1, %s21
    $region7: #{tpu_custom_call.1} parent=1 // loop_footer_branch
      %20 = sbr.rel target = $region3
    $region8: #{tpu_custom_call.1} parent=1 // loop_exit
      _
    %2685 = vsyncpa [#allocation4], 1
    %s2686 = scalar_lea.sflag [#allocation4], 1
    %2687 = vsyncpa %s2686, 1
    %2688 = vsyncpa [#allocation7], 1
    %2689 = vsyncpa [#allocation10], 1
    %2690 = vsyncpa [#allocation5], 1
    %s2691 = scalar_lea.sflag [#allocation5], 1
    %2692 = vsyncpa %s2691, 1

</llo_original>
